<compile_context>
chip_gen: v7x
topology: tpu7x:2x2x1
jax: 0.10.0
libtpu: 0.0.40
codegen_flags: <defaults>
</compile_context>

<pallas_src>
import functools

import jax
import jax.numpy as jnp
from jax.experimental import pallas as pl
from jax.experimental.pallas import tpu as pltpu

POLICY_INPUT_SIZE = 3     # config.policy_input_size
HIDDEN1 = 512             # config.hidden
HIDDEN2 = 256
OUTPUT_SIZE = 1           # config.output_size
INIT_W = 0.001            # config.init_w


def actor_kernel(x_ref, w1_ref, b1_ref, w2_ref, b2_ref, w3_ref, b3_ref, o_ref):
    """Fused 3-layer MLP with batch on the lane axis.

    Shapes (tb = batch tile):
      x_ref : (3, tb)    f32   inputs, batch on lanes
      w1_ref: (512, 3)   f32   layer-1 weight, (out, in)
      b1_ref: (512, 1)   f32
      w2_ref: (256, 512) bf16  layer-2 weight, (out, in)
      b2_ref: (256, 1)   f32
      w3_ref: (256, 1)   f32   layer-3 weight, (in, out)
      b3_ref: (1, 1)     f32
      o_ref : (1, tb)    f32   lane-dense output row
    """
    x = x_ref[...]            # (3, tb)
    w1 = w1_ref[...]          # (512, 3)

    # ---- Layer 1 (K=3): keep it off the MXU -> 3 VPU broadcast FMAs. ----
    h1 = (w1[:, 0:1] * x[0:1, :]
          + w1[:, 1:2] * x[1:2, :]
          + w1[:, 2:3] * x[2:3, :]
          + b1_ref[...])                                    # (512, tb) f32
    h1 = jnp.maximum(h1, 0.0)

    # ---- Layer 2: bf16 MXU matmul, f32 accumulation, f32 epilogue. ----
    h2 = jnp.dot(w2_ref[...], h1.astype(jnp.bfloat16),
                 preferred_element_type=jnp.float32)         # (256, tb) f32
    h2 = jnp.maximum(h2 + b2_ref[...], 0.0)

    # ---- Layer 3 (N=1): VPU multiply + sublane reduction (no MXU). ----
    h3 = jnp.sum(h2 * w3_ref[...], axis=0, keepdims=True) + b3_ref[...]  # (1, tb)

    o_ref[...] = (jnp.tanh(h3) * 2.0).astype(o_ref.dtype)


def _auto_batch_tile(batch):
    """Whole batch for small B (single grid step); 128-multiples otherwise."""
    if batch <= 1024:
        return batch
    for cand in (2048, 1024, 512, 256, 128):
        if batch % cand == 0:
            return cand
    return batch  # awkward batch size: fall back to a single grid step


@functools.partial(jax.jit, static_argnames=("tb",))
def actor_forward(x, w1, b1, w2, b2, w3, b3, *, tb=None):
    """x: (B, 3) f32.  Weights stored in kernel layout (see init_actor_params)."""
    B, F = x.shape
    assert F == POLICY_INPUT_SIZE
    if tb is None:
        tb = _auto_batch_tile(B)
    assert B % tb == 0, "batch must be divisible by the batch tile"
    assert tb == B or tb % 128 == 0, "partial batch tiles must be 128-multiples"
    num_tiles = B // tb

    x_t = x.T                              # (3, B): batch on the lane axis
    w2_bf16 = w2.astype(jnp.bfloat16)      # halve the dominant weight's bytes

    full = lambda shape: pl.BlockSpec(shape, lambda i: (0, 0))

    out = pl.pallas_call(
        actor_kernel,
        out_shape=jax.ShapeDtypeStruct((num_tiles, 1, tb), x.dtype),
        grid_spec=pltpu.PrefetchScalarGridSpec(
            num_scalar_prefetch=0,
            grid=(num_tiles,),
            in_specs=[
                pl.BlockSpec((F, tb), lambda i: (0, i)),          # x (batch on lanes)
                full((HIDDEN1, F)),                               # w1
                full((HIDDEN1, 1)),                               # b1
                full((HIDDEN2, HIDDEN1)),                         # w2 (bf16)
                full((HIDDEN2, 1)),                               # b2
                full((HIDDEN2, 1)),                               # w3
                full((1, 1)),                                     # b3
            ],
            # Lane-dense output slab; leading tile dim squeezed away in kernel.
            out_specs=pl.BlockSpec((None, 1, tb), lambda i: (i, 0, 0)),
        ),
        compiler_params=pltpu.CompilerParams(
            dimension_semantics=("parallel",)),
    )(x_t, w1, b1, w2_bf16, b2, w3, b3)

    return out.reshape(B, OUTPUT_SIZE)


def init_actor_params(key):
    """Deterministic init mirroring PyTorch defaults, stored in kernel layout:
      w1: (512, 3)   = liner1.weight  (out, in),   b1: (512, 1)
      w2: (256, 512) = linear2.weight (out, in),   b2: (256, 1)   U(-init_w, init_w)
      w3: (256, 1)   = linear3.weight^T (in, out), b3: (1, 1)
    nn.Linear default init: U(-1/sqrt(fan_in), 1/sqrt(fan_in)) for W and b.
    """
    k1w, k1b, k2w, k2b, k3w, k3b = jax.random.split(key, 6)

    def uni(k, shape, bound):
        return jax.random.uniform(k, shape, jnp.float32, -bound, bound)

    bound1 = 1.0 / jnp.sqrt(POLICY_INPUT_SIZE)
    bound3 = 1.0 / jnp.sqrt(HIDDEN2)

    w1 = uni(k1w, (HIDDEN1, POLICY_INPUT_SIZE), bound1)
    b1 = uni(k1b, (HIDDEN1, 1), bound1)
    w2 = uni(k2w, (HIDDEN2, HIDDEN1), INIT_W)
    b2 = uni(k2b, (HIDDEN2, 1), INIT_W)
    w3 = uni(k3w, (HIDDEN2, OUTPUT_SIZE), bound3)
    b3 = uni(k3b, (1, OUTPUT_SIZE), bound3)
    return w1, b1, w2, b2, w3, b3


def actor_ref(x, w1, b1, w2, b2, w3, b3):
    """Pure-JAX f32 reference for correctness checking."""
    h1 = jnp.maximum(x @ w1.T + b1.T, 0.0)
    h2 = jnp.maximum(h1 @ w2.T + b2.T, 0.0)
    return jnp.tanh(h2 @ w3 + b3) * 2.0


if __name__ == "__main__":
    key = jax.random.PRNGKey(0)
    k_params, k_x = jax.random.split(key)

    params = init_actor_params(k_params)

    B = 128  # config.batch_size
    x = jax.random.normal(k_x, (B, POLICY_INPUT_SIZE), jnp.float32)

    out = jax.block_until_ready(actor_forward(x, *params))

    ref = actor_ref(x, *params)
    assert out.shape == (B, OUTPUT_SIZE)
    # Layer-2 operands are bf16 (f32 accumulation), so compare against the
    # pure-f32 reference with a correspondingly loosened tolerance.
    max_err = float(jnp.max(jnp.abs(out - ref)))
    assert max_err < 5e-3, f"mismatch vs reference: max abs err {max_err}"

    print("KERNEL_OK")
</pallas_src>

<mosaic_0001>
module attributes {stable_mosaic.version = 11 : i64} {
  func.func @actor_kernel(%arg0: i32, %arg1: memref<3x128xf32, #tpu.memory_space<vmem>>, %arg2: memref<512x3xf32, #tpu.memory_space<vmem>>, %arg3: memref<512x1xf32, #tpu.memory_space<vmem>>, %arg4: memref<256x512xbf16, #tpu.memory_space<vmem>>, %arg5: memref<256x1xf32, #tpu.memory_space<vmem>>, %arg6: memref<256x1xf32, #tpu.memory_space<vmem>>, %arg7: memref<1x1xf32, #tpu.memory_space<vmem>>, %arg8: memref<1x1x128xf32, #tpu.memory_space<vmem>>) attributes {dimension_semantics = [#tpu.dimension_semantics<parallel>], iteration_bounds = array<i64: 1>, scalar_prefetch = 0 : i64, scratch_operands = 0 : i64, tpu.core_type = #tpu.core_type<tc>, window_params = [{transform_indices = @transform_0, window_bounds = array<i64: 3, 128>}, {pipeline_mode = #tpu.pipeline_mode<synchronous>, transform_indices = @transform_1, window_bounds = array<i64: 512, 3>}, {pipeline_mode = #tpu.pipeline_mode<synchronous>, transform_indices = @transform_2, window_bounds = array<i64: 512, 1>}, {pipeline_mode = #tpu.pipeline_mode<synchronous>, transform_indices = @transform_3, window_bounds = array<i64: 256, 512>}, {pipeline_mode = #tpu.pipeline_mode<synchronous>, transform_indices = @transform_4, window_bounds = array<i64: 256, 1>}, {pipeline_mode = #tpu.pipeline_mode<synchronous>, transform_indices = @transform_5, window_bounds = array<i64: 256, 1>}, {pipeline_mode = #tpu.pipeline_mode<synchronous>, transform_indices = @transform_6, window_bounds = array<i64: 1, 1>}, {transform_indices = @transform_7, window_bounds = array<i64: 1, 1, 128>}]} {
    %c0 = arith.constant 0 : index
    %c0_0 = arith.constant 0 : index
    %0 = vector.load %arg1[%c0, %c0_0] : memref<3x128xf32, #tpu.memory_space<vmem>>, vector<3x128xf32>
    %c0_1 = arith.constant 0 : index
    %c0_2 = arith.constant 0 : index
    %1 = vector.load %arg2[%c0_1, %c0_2] : memref<512x3xf32, #tpu.memory_space<vmem>>, vector<512x3xf32>
    %2 = vector.extract_strided_slice %1 {offsets = [0, 0], sizes = [512, 1], strides = [1, 1]} : vector<512x3xf32> to vector<512x1xf32>
    %3 = vector.extract_strided_slice %0 {offsets = [0, 0], sizes = [1, 128], strides = [1, 1]} : vector<3x128xf32> to vector<1x128xf32>
    %4 = vector.broadcast %2 : vector<512x1xf32> to vector<512x128xf32>
    %5 = vector.broadcast %3 : vector<1x128xf32> to vector<512x128xf32>
    %6 = arith.mulf %4, %5 : vector<512x128xf32>
    %7 = vector.extract_strided_slice %1 {offsets = [0, 1], sizes = [512, 1], strides = [1, 1]} : vector<512x3xf32> to vector<512x1xf32>
    %8 = vector.extract_strided_slice %0 {offsets = [1, 0], sizes = [1, 128], strides = [1, 1]} : vector<3x128xf32> to vector<1x128xf32>
    %9 = vector.broadcast %7 : vector<512x1xf32> to vector<512x128xf32>
    %10 = vector.broadcast %8 : vector<1x128xf32> to vector<512x128xf32>
    %11 = arith.mulf %9, %10 : vector<512x128xf32>
    %12 = arith.addf %6, %11 : vector<512x128xf32>
    %13 = vector.extract_strided_slice %1 {offsets = [0, 2], sizes = [512, 1], strides = [1, 1]} : vector<512x3xf32> to vector<512x1xf32>
    %14 = vector.extract_strided_slice %0 {offsets = [2, 0], sizes = [1, 128], strides = [1, 1]} : vector<3x128xf32> to vector<1x128xf32>
    %15 = vector.broadcast %13 : vector<512x1xf32> to vector<512x128xf32>
    %16 = vector.broadcast %14 : vector<1x128xf32> to vector<512x128xf32>
    %17 = arith.mulf %15, %16 : vector<512x128xf32>
    %18 = arith.addf %12, %17 : vector<512x128xf32>
    %c0_3 = arith.constant 0 : index
    %c0_4 = arith.constant 0 : index
    %19 = vector.load %arg3[%c0_3, %c0_4] : memref<512x1xf32, #tpu.memory_space<vmem>>, vector<512x1xf32>
    %20 = vector.broadcast %19 : vector<512x1xf32> to vector<512x128xf32>
    %21 = arith.addf %18, %20 : vector<512x128xf32>
    %cst = arith.constant 0.000000e+00 : f32
    %22 = vector.broadcast %cst : f32 to vector<512x128xf32>
    %23 = arith.maximumf %21, %22 : vector<512x128xf32>
    %c0_5 = arith.constant 0 : index
    %c0_6 = arith.constant 0 : index
    %24 = vector.load %arg4[%c0_5, %c0_6] : memref<256x512xbf16, #tpu.memory_space<vmem>>, vector<256x512xbf16>
    %25 = arith.truncf %23 : vector<512x128xf32> to vector<512x128xbf16>
    %cst_7 = arith.constant dense<0.000000e+00> : vector<256x128xf32>
    %26 = tpu.matmul %24, %25, %cst_7 {dimension_numbers = #tpu.dot_dimension_numbers<[1], [0], [0], [1], [0, 0, 1, 1], [], []>} : vector<256x512xbf16>, vector<512x128xbf16>, vector<256x128xf32> -> vector<256x128xf32>
    %c0_8 = arith.constant 0 : index
    %c0_9 = arith.constant 0 : index
    %27 = vector.load %arg5[%c0_8, %c0_9] : memref<256x1xf32, #tpu.memory_space<vmem>>, vector<256x1xf32>
    %28 = vector.broadcast %27 : vector<256x1xf32> to vector<256x128xf32>
    %29 = arith.addf %26, %28 : vector<256x128xf32>
    %cst_10 = arith.constant 0.000000e+00 : f32
    %30 = vector.broadcast %cst_10 : f32 to vector<256x128xf32>
    %31 = arith.maximumf %29, %30 : vector<256x128xf32>
    %c0_11 = arith.constant 0 : index
    %c0_12 = arith.constant 0 : index
    %32 = vector.load %arg6[%c0_11, %c0_12] : memref<256x1xf32, #tpu.memory_space<vmem>>, vector<256x1xf32>
    %33 = vector.broadcast %32 : vector<256x1xf32> to vector<256x128xf32>
    %34 = arith.mulf %31, %33 : vector<256x128xf32>
    %cst_13 = arith.constant dense<0.000000e+00> : vector<128xf32>
    %35 = vector.multi_reduction <add>, %34, %cst_13 [0] : vector<256x128xf32> to vector<128xf32>
    %36 = vector.shape_cast %35 : vector<128xf32> to vector<1x128xf32>
    %c0_14 = arith.constant 0 : index
    %c0_15 = arith.constant 0 : index
    %37 = vector.load %arg7[%c0_14, %c0_15] : memref<1x1xf32, #tpu.memory_space<vmem>>, vector<1x1xf32>
    %38 = vector.broadcast %37 : vector<1x1xf32> to vector<1x128xf32>
    %39 = arith.addf %36, %38 : vector<1x128xf32>
    %40 = math.tanh %39 : vector<1x128xf32>
    %cst_16 = arith.constant 2.000000e+00 : f32
    %41 = vector.broadcast %cst_16 : f32 to vector<1x128xf32>
    %42 = arith.mulf %40, %41 : vector<1x128xf32>
    %c0_17 = arith.constant 0 : index
    %c0_18 = arith.constant 0 : index
    %c0_19 = arith.constant 0 : index
    %43 = vector.load %arg8[%c0_17, %c0_18, %c0_19] : memref<1x1x128xf32, #tpu.memory_space<vmem>>, vector<1x1x128xf32>
    %44 = vector.shape_cast %43 : vector<1x1x128xf32> to vector<1x128xf32>
    %45 = vector.shape_cast %42 : vector<1x128xf32> to vector<1x1x128xf32>
    tpu.vector_store %arg8[%c0_17, %c0_18, %c0_19], %45 {strides = array<i32>} : memref<1x1x128xf32, #tpu.memory_space<vmem>>, vector<1x1x128xf32>,
    return
  }
  func.func @transform_0(%arg0: i32) -> (i32, i32) {
    %c0_i32 = arith.constant 0 : i32
    %c0_i32_0 = arith.constant 0 : i32
    return %c0_i32, %arg0 : i32, i32
  }
  func.func @transform_1(%arg0: i32) -> (i32, i32) {
    %c0_i32 = arith.constant 0 : i32
    %c0_i32_0 = arith.constant 0 : i32
    %c0_i32_1 = arith.constant 0 : i32
    return %c0_i32, %c0_i32_0 : i32, i32
  }
  func.func @transform_2(%arg0: i32) -> (i32, i32) {
    %c0_i32 = arith.constant 0 : i32
    %c0_i32_0 = arith.constant 0 : i32
    %c0_i32_1 = arith.constant 0 : i32
    return %c0_i32, %c0_i32_0 : i32, i32
  }
  func.func @transform_3(%arg0: i32) -> (i32, i32) {
    %c0_i32 = arith.constant 0 : i32
    %c0_i32_0 = arith.constant 0 : i32
    %c0_i32_1 = arith.constant 0 : i32
    return %c0_i32, %c0_i32_0 : i32, i32
  }
  func.func @transform_4(%arg0: i32) -> (i32, i32) {
    %c0_i32 = arith.constant 0 : i32
    %c0_i32_0 = arith.constant 0 : i32
    %c0_i32_1 = arith.constant 0 : i32
    return %c0_i32, %c0_i32_0 : i32, i32
  }
  func.func @transform_5(%arg0: i32) -> (i32, i32) {
    %c0_i32 = arith.constant 0 : i32
    %c0_i32_0 = arith.constant 0 : i32
    %c0_i32_1 = arith.constant 0 : i32
    return %c0_i32, %c0_i32_0 : i32, i32
  }
  func.func @transform_6(%arg0: i32) -> (i32, i32) {
    %c0_i32 = arith.constant 0 : i32
    %c0_i32_0 = arith.constant 0 : i32
    %c0_i32_1 = arith.constant 0 : i32
    return %c0_i32, %c0_i32_0 : i32, i32
  }
  func.func @transform_7(%arg0: i32) -> (i32, i32, i32) {
    %c0_i32 = arith.constant 0 : i32
    %c0_i32_0 = arith.constant 0 : i32
    %c0_i32_1 = arith.constant 0 : i32
    return %arg0, %c0_i32, %c0_i32_0 : i32, i32, i32
  }
}

</mosaic_0001>

<llo_original>
// kernel: actor_forward.1
$region0: #{actor_forward.1}
  #allocation0 [shape = 'u32[]', space=smem, size = 0x4, offset = 0x4, fixed_abs, tag = 'smem constant byte address 0x4 - core index']
  #allocation1 [shape = 'u32[144,128]{1,0:T(1,128)}', space=vmem, size = 0x12000, scoped, tag = 'internal scratch']
  #allocation2 [shape = 'f32[1,1]{1,0:T(1,128)S(1)}', space=vmem, size = 0x200, scoped, tag = 'scoped memory for actor_forward.1']
  %s0 = inlined_call_operand.vmem [shape: f32[3,128], index: 0, kind: input, shape index: {}]
  %s1 = inlined_call_operand.vmem [shape: f32[512,3], index: 1, kind: input, shape index: {}]
  %s2 = inlined_call_operand.vmem [shape: f32[512,1], index: 2, kind: input, shape index: {}]
  %s3 = inlined_call_operand.vmem [shape: bf16[256,512], index: 3, kind: input, shape index: {}]
  %s4 = inlined_call_operand.vmem [shape: f32[256,1], index: 4, kind: input, shape index: {}]
  %s5 = inlined_call_operand.vmem [shape: f32[256,1], index: 5, kind: input, shape index: {}]
  %s6 = inlined_call_operand.<no memory space> [shape: f32[1,1], index: 6, kind: input, shape index: {}]
  %s7 = inlined_call_operand.hbm [shape: f32[1,1,128], index: 7, kind: output, shape index: {}]
  %s8 = sld [smem:[#allocation0]]
  $region38: #{actor_forward.1} parent=0
    _
  %s10 = ssub.s32 1, %s8
  %s11 = scalar_select 0, %s10, %s8
  %v12 = vstv %s6
  %13 = vst [vmem:[#allocation2] sm:$0x1] %v12
  $region1: #{actor_forward.1} parent=0
    #allocation3 [shape = 'u8[512]{0}', space=vmem, size = 0x400, scoped, tag = 'output window, operand 0, single buffered']
    #allocation4 [shape = 's32[1]{0}', space=sflag, size = 0x4, scoped, tag = 'scoped memory for actor_forward.1']
    %14 = vsyncpa [#allocation4], 0
    // Predicated region
    $region2: #{actor_forward.1} parent=1 // pred_check
      _
    $region3: #{actor_forward.1} parent=1 // pred_check_branch
      %16 = sbr.rel (0) target = $region5
    $region4: #{actor_forward.1} parent=1 // pred_region
      _
    $region5: #{actor_forward.1} parent=1 // pred_fallthru
      _
    // Predicated region
    $region6: #{actor_forward.1} parent=1 // pred_check
      _
    $region7: #{actor_forward.1} parent=1 // pred_check_branch
      %18 = sbr.rel (0) target = $region9
    $region8: #{actor_forward.1} parent=1 // pred_region
      _
    $region9: #{actor_forward.1} parent=1 // pred_fallthru
      _
    // Predicated region
    $region10: #{actor_forward.1} parent=1 // pred_check
      _
    $region11: #{actor_forward.1} parent=1 // pred_check_branch
      %20 = sbr.rel (0) target = $region13
    $region12: #{actor_forward.1} parent=1 // pred_region
      _
    $region13: #{actor_forward.1} parent=1 // pred_fallthru
      _
    // Predicated region
    $region14: #{actor_forward.1} parent=1 // pred_check
      _
    $region15: #{actor_forward.1} parent=1 // pred_check_branch
      %22 = sbr.rel (0) target = $region17
    $region16: #{actor_forward.1} parent=1 // pred_region
      _
    $region17: #{actor_forward.1} parent=1 // pred_fallthru
      _
    // Predicated region
    $region18: #{actor_forward.1} parent=1 // pred_check
      _
    $region19: #{actor_forward.1} parent=1 // pred_check_branch
      %24 = sbr.rel (0) target = $region21
    $region20: #{actor_forward.1} parent=1 // pred_region
      _
    $region21: #{actor_forward.1} parent=1 // pred_fallthru
      _
    // Predicated region
    $region22: #{actor_forward.1} parent=1 // pred_check
      _
    $region23: #{actor_forward.1} parent=1 // pred_check_branch
      %26 = sbr.rel (0) target = $region25
    $region24: #{actor_forward.1} parent=1 // pred_region
      _
    $region25: #{actor_forward.1} parent=1 // pred_fallthru
      _
    // Predicated region
    $region26: #{actor_forward.1} parent=1 // pred_check
      _
    $region27: #{actor_forward.1} parent=1 // pred_check_branch
      %28 = sbr.rel (0) target = $region29
    $region28: #{actor_forward.1} parent=1 // pred_region
      _
    $region29: #{actor_forward.1} parent=1 // pred_fallthru
      _
    %v30 = vld [vmem:[%s0] sm:$0x7]
    %v31 = vld [vmem:[%s1] sm:$0xff]
    %v32 = vld [vmem:[%s1 + $0x8] sm:$0xff]
    %v33 = vld [vmem:[%s1 + $0x10] sm:$0xff]
    %v34 = vld [vmem:[%s1 + $0x18] sm:$0xff]
    %v35 = vld [vmem:[%s1 + $0x20] sm:$0xff]
    %v36 = vld [vmem:[%s1 + $0x28] sm:$0xff]
    %v37 = vld [vmem:[%s1 + $0x30] sm:$0xff]
    %v38 = vld [vmem:[%s1 + $0x38] sm:$0xff]
    %v39 = vld [vmem:[%s1 + $0x40] sm:$0xff]
    %v40 = vld [vmem:[%s1 + $0x48] sm:$0xff]
    %v41 = vld [vmem:[%s1 + $0x50] sm:$0xff]
    %v42 = vld [vmem:[%s1 + $0x58] sm:$0xff]
    %v43 = vld [vmem:[%s1 + $0x60] sm:$0xff]
    %v44 = vld [vmem:[%s1 + $0x68] sm:$0xff]
    %v45 = vld [vmem:[%s1 + $0x70] sm:$0xff]
    %v46 = vld [vmem:[%s1 + $0x78] sm:$0xff]
    %v47 = vld [vmem:[%s1 + $0x80] sm:$0xff]
    %v48 = vld [vmem:[%s1 + $0x88] sm:$0xff]
    %v49 = vld [vmem:[%s1 + $0x90] sm:$0xff]
    %v50 = vld [vmem:[%s1 + $0x98] sm:$0xff]
    %v51 = vld [vmem:[%s1 + $0xa0] sm:$0xff]
    %v52 = vld [vmem:[%s1 + $0xa8] sm:$0xff]
    %v53 = vld [vmem:[%s1 + $0xb0] sm:$0xff]
    %v54 = vld [vmem:[%s1 + $0xb8] sm:$0xff]
    %v55 = vld [vmem:[%s1 + $0xc0] sm:$0xff]
    %v56 = vld [vmem:[%s1 + $0xc8] sm:$0xff]
    %v57 = vld [vmem:[%s1 + $0xd0] sm:$0xff]
    %v58 = vld [vmem:[%s1 + $0xd8] sm:$0xff]
    %v59 = vld [vmem:[%s1 + $0xe0] sm:$0xff]
    %v60 = vld [vmem:[%s1 + $0xe8] sm:$0xff]
    %v61 = vld [vmem:[%s1 + $0xf0] sm:$0xff]
    %v62 = vld [vmem:[%s1 + $0xf8] sm:$0xff]
    %v63 = vld [vmem:[%s1 + $0x100] sm:$0xff]
    %v64 = vld [vmem:[%s1 + $0x108] sm:$0xff]
    %v65 = vld [vmem:[%s1 + $0x110] sm:$0xff]
    %v66 = vld [vmem:[%s1 + $0x118] sm:$0xff]
    %v67 = vld [vmem:[%s1 + $0x120] sm:$0xff]
    %v68 = vld [vmem:[%s1 + $0x128] sm:$0xff]
    %v69 = vld [vmem:[%s1 + $0x130] sm:$0xff]
    %v70 = vld [vmem:[%s1 + $0x138] sm:$0xff]
    %v71 = vld [vmem:[%s1 + $0x140] sm:$0xff]
    %v72 = vld [vmem:[%s1 + $0x148] sm:$0xff]
    %v73 = vld [vmem:[%s1 + $0x150] sm:$0xff]
    %v74 = vld [vmem:[%s1 + $0x158] sm:$0xff]
    %v75 = vld [vmem:[%s1 + $0x160] sm:$0xff]
    %v76 = vld [vmem:[%s1 + $0x168] sm:$0xff]
    %v77 = vld [vmem:[%s1 + $0x170] sm:$0xff]
    %v78 = vld [vmem:[%s1 + $0x178] sm:$0xff]
    %v79 = vld [vmem:[%s1 + $0x180] sm:$0xff]
    %v80 = vld [vmem:[%s1 + $0x188] sm:$0xff]
    %v81 = vld [vmem:[%s1 + $0x190] sm:$0xff]
    %v82 = vld [vmem:[%s1 + $0x198] sm:$0xff]
    %v83 = vld [vmem:[%s1 + $0x1a0] sm:$0xff]
    %v84 = vld [vmem:[%s1 + $0x1a8] sm:$0xff]
    %v85 = vld [vmem:[%s1 + $0x1b0] sm:$0xff]
    %v86 = vld [vmem:[%s1 + $0x1b8] sm:$0xff]
    %v87 = vld [vmem:[%s1 + $0x1c0] sm:$0xff]
    %v88 = vld [vmem:[%s1 + $0x1c8] sm:$0xff]
    %v89 = vld [vmem:[%s1 + $0x1d0] sm:$0xff]
    %v90 = vld [vmem:[%s1 + $0x1d8] sm:$0xff]
    %v91 = vld [vmem:[%s1 + $0x1e0] sm:$0xff]
    %v92 = vld [vmem:[%s1 + $0x1e8] sm:$0xff]
    %v93 = vld [vmem:[%s1 + $0x1f0] sm:$0xff]
    %v94 = vld [vmem:[%s1 + $0x1f8] sm:$0xff]
    %96 = vset.pattern.permute.xlu0 0
    %97 = vperm.xlu0 %96, %v31
    %v98 = vpop.permute.xlu0 %97
    %101 = vset.pattern.permute.xlu0 0
    %102 = vperm.xlu0 %101, %v32
    %v103 = vpop.permute.xlu0 %102
    %106 = vset.pattern.permute.xlu0 0
    %107 = vperm.xlu0 %106, %v33
    %v108 = vpop.permute.xlu0 %107
    %111 = vset.pattern.permute.xlu0 0
    %112 = vperm.xlu0 %111, %v34
    %v113 = vpop.permute.xlu0 %112
    %116 = vset.pattern.permute.xlu0 0
    %117 = vperm.xlu0 %116, %v35
    %v118 = vpop.permute.xlu0 %117
    %121 = vset.pattern.permute.xlu0 0
    %122 = vperm.xlu0 %121, %v36
    %v123 = vpop.permute.xlu0 %122
    %126 = vset.pattern.permute.xlu0 0
    %127 = vperm.xlu0 %126, %v37
    %v128 = vpop.permute.xlu0 %127
    %131 = vset.pattern.permute.xlu0 0
    %132 = vperm.xlu0 %131, %v38
    %v133 = vpop.permute.xlu0 %132
    %136 = vset.pattern.permute.xlu0 0
    %137 = vperm.xlu0 %136, %v39
    %v138 = vpop.permute.xlu0 %137
    %141 = vset.pattern.permute.xlu0 0
    %142 = vperm.xlu0 %141, %v40
    %v143 = vpop.permute.xlu0 %142
    %146 = vset.pattern.permute.xlu0 0
    %147 = vperm.xlu0 %146, %v41
    %v148 = vpop.permute.xlu0 %147
    %151 = vset.pattern.permute.xlu0 0
    %152 = vperm.xlu0 %151, %v42
    %v153 = vpop.permute.xlu0 %152
    %156 = vset.pattern.permute.xlu0 0
    %157 = vperm.xlu0 %156, %v43
    %v158 = vpop.permute.xlu0 %157
    %161 = vset.pattern.permute.xlu0 0
    %162 = vperm.xlu0 %161, %v44
    %v163 = vpop.permute.xlu0 %162
    %166 = vset.pattern.permute.xlu0 0
    %167 = vperm.xlu0 %166, %v45
    %v168 = vpop.permute.xlu0 %167
    %171 = vset.pattern.permute.xlu0 0
    %172 = vperm.xlu0 %171, %v46
    %v173 = vpop.permute.xlu0 %172
    %176 = vset.pattern.permute.xlu0 0
    %177 = vperm.xlu0 %176, %v47
    %v178 = vpop.permute.xlu0 %177
    %181 = vset.pattern.permute.xlu0 0
    %182 = vperm.xlu0 %181, %v48
    %v183 = vpop.permute.xlu0 %182
    %186 = vset.pattern.permute.xlu0 0
    %187 = vperm.xlu0 %186, %v49
    %v188 = vpop.permute.xlu0 %187
    %191 = vset.pattern.permute.xlu0 0
    %192 = vperm.xlu0 %191, %v50
    %v193 = vpop.permute.xlu0 %192
    %196 = vset.pattern.permute.xlu0 0
    %197 = vperm.xlu0 %196, %v51
    %v198 = vpop.permute.xlu0 %197
    %201 = vset.pattern.permute.xlu0 0
    %202 = vperm.xlu0 %201, %v52
    %v203 = vpop.permute.xlu0 %202
    %206 = vset.pattern.permute.xlu0 0
    %207 = vperm.xlu0 %206, %v53
    %v208 = vpop.permute.xlu0 %207
    %211 = vset.pattern.permute.xlu0 0
    %212 = vperm.xlu0 %211, %v54
    %v213 = vpop.permute.xlu0 %212
    %216 = vset.pattern.permute.xlu0 0
    %217 = vperm.xlu0 %216, %v55
    %v218 = vpop.permute.xlu0 %217
    %221 = vset.pattern.permute.xlu0 0
    %222 = vperm.xlu0 %221, %v56
    %v223 = vpop.permute.xlu0 %222
    %226 = vset.pattern.permute.xlu0 0
    %227 = vperm.xlu0 %226, %v57
    %v228 = vpop.permute.xlu0 %227
    %231 = vset.pattern.permute.xlu0 0
    %232 = vperm.xlu0 %231, %v58
    %v233 = vpop.permute.xlu0 %232
    %236 = vset.pattern.permute.xlu0 0
    %237 = vperm.xlu0 %236, %v59
    %v238 = vpop.permute.xlu0 %237
    %241 = vset.pattern.permute.xlu0 0
    %242 = vperm.xlu0 %241, %v60
    %v243 = vpop.permute.xlu0 %242
    %246 = vset.pattern.permute.xlu0 0
    %247 = vperm.xlu0 %246, %v61
    %v248 = vpop.permute.xlu0 %247
    %251 = vset.pattern.permute.xlu0 0
    %252 = vperm.xlu0 %251, %v62
    %v253 = vpop.permute.xlu0 %252
    %256 = vset.pattern.permute.xlu0 0
    %257 = vperm.xlu0 %256, %v63
    %v258 = vpop.permute.xlu0 %257
    %261 = vset.pattern.permute.xlu0 0
    %262 = vperm.xlu0 %261, %v64
    %v263 = vpop.permute.xlu0 %262
    %266 = vset.pattern.permute.xlu0 0
    %267 = vperm.xlu0 %266, %v65
    %v268 = vpop.permute.xlu0 %267
    %271 = vset.pattern.permute.xlu0 0
    %272 = vperm.xlu0 %271, %v66
    %v273 = vpop.permute.xlu0 %272
    %276 = vset.pattern.permute.xlu0 0
    %277 = vperm.xlu0 %276, %v67
    %v278 = vpop.permute.xlu0 %277
    %281 = vset.pattern.permute.xlu0 0
    %282 = vperm.xlu0 %281, %v68
    %v283 = vpop.permute.xlu0 %282
    %286 = vset.pattern.permute.xlu0 0
    %287 = vperm.xlu0 %286, %v69
    %v288 = vpop.permute.xlu0 %287
    %291 = vset.pattern.permute.xlu0 0
    %292 = vperm.xlu0 %291, %v70
    %v293 = vpop.permute.xlu0 %292
    %296 = vset.pattern.permute.xlu0 0
    %297 = vperm.xlu0 %296, %v71
    %v298 = vpop.permute.xlu0 %297
    %301 = vset.pattern.permute.xlu0 0
    %302 = vperm.xlu0 %301, %v72
    %v303 = vpop.permute.xlu0 %302
    %306 = vset.pattern.permute.xlu0 0
    %307 = vperm.xlu0 %306, %v73
    %v308 = vpop.permute.xlu0 %307
    %311 = vset.pattern.permute.xlu0 0
    %312 = vperm.xlu0 %311, %v74
    %v313 = vpop.permute.xlu0 %312
    %316 = vset.pattern.permute.xlu0 0
    %317 = vperm.xlu0 %316, %v75
    %v318 = vpop.permute.xlu0 %317
    %321 = vset.pattern.permute.xlu0 0
    %322 = vperm.xlu0 %321, %v76
    %v323 = vpop.permute.xlu0 %322
    %326 = vset.pattern.permute.xlu0 0
    %327 = vperm.xlu0 %326, %v77
    %v328 = vpop.permute.xlu0 %327
    %331 = vset.pattern.permute.xlu0 0
    %332 = vperm.xlu0 %331, %v78
    %v333 = vpop.permute.xlu0 %332
    %336 = vset.pattern.permute.xlu0 0
    %337 = vperm.xlu0 %336, %v79
    %v338 = vpop.permute.xlu0 %337
    %341 = vset.pattern.permute.xlu0 0
    %342 = vperm.xlu0 %341, %v80
    %v343 = vpop.permute.xlu0 %342
    %346 = vset.pattern.permute.xlu0 0
    %347 = vperm.xlu0 %346, %v81
    %v348 = vpop.permute.xlu0 %347
    %351 = vset.pattern.permute.xlu0 0
    %352 = vperm.xlu0 %351, %v82
    %v353 = vpop.permute.xlu0 %352
    %356 = vset.pattern.permute.xlu0 0
    %357 = vperm.xlu0 %356, %v83
    %v358 = vpop.permute.xlu0 %357
    %361 = vset.pattern.permute.xlu0 0
    %362 = vperm.xlu0 %361, %v84
    %v363 = vpop.permute.xlu0 %362
    %366 = vset.pattern.permute.xlu0 0
    %367 = vperm.xlu0 %366, %v85
    %v368 = vpop.permute.xlu0 %367
    %371 = vset.pattern.permute.xlu0 0
    %372 = vperm.xlu0 %371, %v86
    %v373 = vpop.permute.xlu0 %372
    %376 = vset.pattern.permute.xlu0 0
    %377 = vperm.xlu0 %376, %v87
    %v378 = vpop.permute.xlu0 %377
    %381 = vset.pattern.permute.xlu0 0
    %382 = vperm.xlu0 %381, %v88
    %v383 = vpop.permute.xlu0 %382
    %386 = vset.pattern.permute.xlu0 0
    %387 = vperm.xlu0 %386, %v89
    %v388 = vpop.permute.xlu0 %387
    %391 = vset.pattern.permute.xlu0 0
    %392 = vperm.xlu0 %391, %v90
    %v393 = vpop.permute.xlu0 %392
    %396 = vset.pattern.permute.xlu0 0
    %397 = vperm.xlu0 %396, %v91
    %v398 = vpop.permute.xlu0 %397
    %401 = vset.pattern.permute.xlu0 0
    %402 = vperm.xlu0 %401, %v92
    %v403 = vpop.permute.xlu0 %402
    %406 = vset.pattern.permute.xlu0 0
    %407 = vperm.xlu0 %406, %v93
    %v408 = vpop.permute.xlu0 %407
    %411 = vset.pattern.permute.xlu0 0
    %412 = vperm.xlu0 %411, %v94
    %v413 = vpop.permute.xlu0 %412
    %v415 = vlaneseq
    %v416 = vshrl.u32 %v415, 7
    %v417 = vsub.s32 0, %v416
    %v418 = vrot.slane %v30, %v417
    %v419 = vmul.f32 %v98, %v418
    %v420 = vmul.f32 %v103, %v418
    %v421 = vmul.f32 %v108, %v418
    %v422 = vmul.f32 %v113, %v418
    %v423 = vmul.f32 %v118, %v418
    %v424 = vmul.f32 %v123, %v418
    %v425 = vmul.f32 %v128, %v418
    %v426 = vmul.f32 %v133, %v418
    %v427 = vmul.f32 %v138, %v418
    %v428 = vmul.f32 %v143, %v418
    %v429 = vmul.f32 %v148, %v418
    %v430 = vmul.f32 %v153, %v418
    %v431 = vmul.f32 %v158, %v418
    %v432 = vmul.f32 %v163, %v418
    %v433 = vmul.f32 %v168, %v418
    %v434 = vmul.f32 %v173, %v418
    %v435 = vmul.f32 %v178, %v418
    %v436 = vmul.f32 %v183, %v418
    %v437 = vmul.f32 %v188, %v418
    %v438 = vmul.f32 %v193, %v418
    %v439 = vmul.f32 %v198, %v418
    %v440 = vmul.f32 %v203, %v418
    %v441 = vmul.f32 %v208, %v418
    %v442 = vmul.f32 %v213, %v418
    %v443 = vmul.f32 %v218, %v418
    %v444 = vmul.f32 %v223, %v418
    %v445 = vmul.f32 %v228, %v418
    %v446 = vmul.f32 %v233, %v418
    %v447 = vmul.f32 %v238, %v418
    %v448 = vmul.f32 %v243, %v418
    %v449 = vmul.f32 %v248, %v418
    %v450 = vmul.f32 %v253, %v418
    %v451 = vmul.f32 %v258, %v418
    %v452 = vmul.f32 %v263, %v418
    %v453 = vmul.f32 %v268, %v418
    %v454 = vmul.f32 %v273, %v418
    %v455 = vmul.f32 %v278, %v418
    %v456 = vmul.f32 %v283, %v418
    %v457 = vmul.f32 %v288, %v418
    %v458 = vmul.f32 %v293, %v418
    %v459 = vmul.f32 %v298, %v418
    %v460 = vmul.f32 %v303, %v418
    %v461 = vmul.f32 %v308, %v418
    %v462 = vmul.f32 %v313, %v418
    %v463 = vmul.f32 %v318, %v418
    %v464 = vmul.f32 %v323, %v418
    %v465 = vmul.f32 %v328, %v418
    %v466 = vmul.f32 %v333, %v418
    %v467 = vmul.f32 %v338, %v418
    %v468 = vmul.f32 %v343, %v418
    %v469 = vmul.f32 %v348, %v418
    %v470 = vmul.f32 %v353, %v418
    %v471 = vmul.f32 %v358, %v418
    %v472 = vmul.f32 %v363, %v418
    %v473 = vmul.f32 %v368, %v418
    %v474 = vmul.f32 %v373, %v418
    %v475 = vmul.f32 %v378, %v418
    %v476 = vmul.f32 %v383, %v418
    %v477 = vmul.f32 %v388, %v418
    %v478 = vmul.f32 %v393, %v418
    %v479 = vmul.f32 %v398, %v418
    %v480 = vmul.f32 %v403, %v418
    %v481 = vmul.f32 %v408, %v418
    %v482 = vmul.f32 %v413, %v418
    %483 = vset.pattern.permute.xlu0 1
    %484 = vperm.xlu0 %483, %v31
    %v485 = vpop.permute.xlu0 %484
    %487 = vset.pattern.permute.xlu0 1
    %488 = vperm.xlu0 %487, %v32
    %v489 = vpop.permute.xlu0 %488
    %491 = vset.pattern.permute.xlu0 1
    %492 = vperm.xlu0 %491, %v33
    %v493 = vpop.permute.xlu0 %492
    %495 = vset.pattern.permute.xlu0 1
    %496 = vperm.xlu0 %495, %v34
    %v497 = vpop.permute.xlu0 %496
    %499 = vset.pattern.permute.xlu0 1
    %500 = vperm.xlu0 %499, %v35
    %v501 = vpop.permute.xlu0 %500
    %503 = vset.pattern.permute.xlu0 1
    %504 = vperm.xlu0 %503, %v36
    %v505 = vpop.permute.xlu0 %504
    %507 = vset.pattern.permute.xlu0 1
    %508 = vperm.xlu0 %507, %v37
    %v509 = vpop.permute.xlu0 %508
    %511 = vset.pattern.permute.xlu0 1
    %512 = vperm.xlu0 %511, %v38
    %v513 = vpop.permute.xlu0 %512
    %515 = vset.pattern.permute.xlu0 1
    %516 = vperm.xlu0 %515, %v39
    %v517 = vpop.permute.xlu0 %516
    %519 = vset.pattern.permute.xlu0 1
    %520 = vperm.xlu0 %519, %v40
    %v521 = vpop.permute.xlu0 %520
    %523 = vset.pattern.permute.xlu0 1
    %524 = vperm.xlu0 %523, %v41
    %v525 = vpop.permute.xlu0 %524
    %527 = vset.pattern.permute.xlu0 1
    %528 = vperm.xlu0 %527, %v42
    %v529 = vpop.permute.xlu0 %528
    %531 = vset.pattern.permute.xlu0 1
    %532 = vperm.xlu0 %531, %v43
    %v533 = vpop.permute.xlu0 %532
    %535 = vset.pattern.permute.xlu0 1
    %536 = vperm.xlu0 %535, %v44
    %v537 = vpop.permute.xlu0 %536
    %539 = vset.pattern.permute.xlu0 1
    %540 = vperm.xlu0 %539, %v45
    %v541 = vpop.permute.xlu0 %540
    %543 = vset.pattern.permute.xlu0 1
    %544 = vperm.xlu0 %543, %v46
    %v545 = vpop.permute.xlu0 %544
    %547 = vset.pattern.permute.xlu0 1
    %548 = vperm.xlu0 %547, %v47
    %v549 = vpop.permute.xlu0 %548
    %551 = vset.pattern.permute.xlu0 1
    %552 = vperm.xlu0 %551, %v48
    %v553 = vpop.permute.xlu0 %552
    %555 = vset.pattern.permute.xlu0 1
    %556 = vperm.xlu0 %555, %v49
    %v557 = vpop.permute.xlu0 %556
    %559 = vset.pattern.permute.xlu0 1
    %560 = vperm.xlu0 %559, %v50
    %v561 = vpop.permute.xlu0 %560
    %563 = vset.pattern.permute.xlu0 1
    %564 = vperm.xlu0 %563, %v51
    %v565 = vpop.permute.xlu0 %564
    %567 = vset.pattern.permute.xlu0 1
    %568 = vperm.xlu0 %567, %v52
    %v569 = vpop.permute.xlu0 %568
    %571 = vset.pattern.permute.xlu0 1
    %572 = vperm.xlu0 %571, %v53
    %v573 = vpop.permute.xlu0 %572
    %575 = vset.pattern.permute.xlu0 1
    %576 = vperm.xlu0 %575, %v54
    %v577 = vpop.permute.xlu0 %576
    %579 = vset.pattern.permute.xlu0 1
    %580 = vperm.xlu0 %579, %v55
    %v581 = vpop.permute.xlu0 %580
    %583 = vset.pattern.permute.xlu0 1
    %584 = vperm.xlu0 %583, %v56
    %v585 = vpop.permute.xlu0 %584
    %587 = vset.pattern.permute.xlu0 1
    %588 = vperm.xlu0 %587, %v57
    %v589 = vpop.permute.xlu0 %588
    %591 = vset.pattern.permute.xlu0 1
    %592 = vperm.xlu0 %591, %v58
    %v593 = vpop.permute.xlu0 %592
    %595 = vset.pattern.permute.xlu0 1
    %596 = vperm.xlu0 %595, %v59
    %v597 = vpop.permute.xlu0 %596
    %599 = vset.pattern.permute.xlu0 1
    %600 = vperm.xlu0 %599, %v60
    %v601 = vpop.permute.xlu0 %600
    %603 = vset.pattern.permute.xlu0 1
    %604 = vperm.xlu0 %603, %v61
    %v605 = vpop.permute.xlu0 %604
    %607 = vset.pattern.permute.xlu0 1
    %608 = vperm.xlu0 %607, %v62
    %v609 = vpop.permute.xlu0 %608
    %611 = vset.pattern.permute.xlu0 1
    %612 = vperm.xlu0 %611, %v63
    %v613 = vpop.permute.xlu0 %612
    %615 = vset.pattern.permute.xlu0 1
    %616 = vperm.xlu0 %615, %v64
    %v617 = vpop.permute.xlu0 %616
    %619 = vset.pattern.permute.xlu0 1
    %620 = vperm.xlu0 %619, %v65
    %v621 = vpop.permute.xlu0 %620
    %623 = vset.pattern.permute.xlu0 1
    %624 = vperm.xlu0 %623, %v66
    %v625 = vpop.permute.xlu0 %624
    %627 = vset.pattern.permute.xlu0 1
    %628 = vperm.xlu0 %627, %v67
    %v629 = vpop.permute.xlu0 %628
    %631 = vset.pattern.permute.xlu0 1
    %632 = vperm.xlu0 %631, %v68
    %v633 = vpop.permute.xlu0 %632
    %635 = vset.pattern.permute.xlu0 1
    %636 = vperm.xlu0 %635, %v69
    %v637 = vpop.permute.xlu0 %636
    %639 = vset.pattern.permute.xlu0 1
    %640 = vperm.xlu0 %639, %v70
    %v641 = vpop.permute.xlu0 %640
    %643 = vset.pattern.permute.xlu0 1
    %644 = vperm.xlu0 %643, %v71
    %v645 = vpop.permute.xlu0 %644
    %647 = vset.pattern.permute.xlu0 1
    %648 = vperm.xlu0 %647, %v72
    %v649 = vpop.permute.xlu0 %648
    %651 = vset.pattern.permute.xlu0 1
    %652 = vperm.xlu0 %651, %v73
    %v653 = vpop.permute.xlu0 %652
    %655 = vset.pattern.permute.xlu0 1
    %656 = vperm.xlu0 %655, %v74
    %v657 = vpop.permute.xlu0 %656
    %659 = vset.pattern.permute.xlu0 1
    %660 = vperm.xlu0 %659, %v75
    %v661 = vpop.permute.xlu0 %660
    %663 = vset.pattern.permute.xlu0 1
    %664 = vperm.xlu0 %663, %v76
    %v665 = vpop.permute.xlu0 %664
    %667 = vset.pattern.permute.xlu0 1
    %668 = vperm.xlu0 %667, %v77
    %v669 = vpop.permute.xlu0 %668
    %671 = vset.pattern.permute.xlu0 1
    %672 = vperm.xlu0 %671, %v78
    %v673 = vpop.permute.xlu0 %672
    %675 = vset.pattern.permute.xlu0 1
    %676 = vperm.xlu0 %675, %v79
    %v677 = vpop.permute.xlu0 %676
    %679 = vset.pattern.permute.xlu0 1
    %680 = vperm.xlu0 %679, %v80
    %v681 = vpop.permute.xlu0 %680
    %683 = vset.pattern.permute.xlu0 1
    %684 = vperm.xlu0 %683, %v81
    %v685 = vpop.permute.xlu0 %684
    %687 = vset.pattern.permute.xlu0 1
    %688 = vperm.xlu0 %687, %v82
    %v689 = vpop.permute.xlu0 %688
    %691 = vset.pattern.permute.xlu0 1
    %692 = vperm.xlu0 %691, %v83
    %v693 = vpop.permute.xlu0 %692
    %695 = vset.pattern.permute.xlu0 1
    %696 = vperm.xlu0 %695, %v84
    %v697 = vpop.permute.xlu0 %696
    %699 = vset.pattern.permute.xlu0 1
    %700 = vperm.xlu0 %699, %v85
    %v701 = vpop.permute.xlu0 %700
    %703 = vset.pattern.permute.xlu0 1
    %704 = vperm.xlu0 %703, %v86
    %v705 = vpop.permute.xlu0 %704
    %707 = vset.pattern.permute.xlu0 1
    %708 = vperm.xlu0 %707, %v87
    %v709 = vpop.permute.xlu0 %708
    %711 = vset.pattern.permute.xlu0 1
    %712 = vperm.xlu0 %711, %v88
    %v713 = vpop.permute.xlu0 %712
    %715 = vset.pattern.permute.xlu0 1
    %716 = vperm.xlu0 %715, %v89
    %v717 = vpop.permute.xlu0 %716
    %719 = vset.pattern.permute.xlu0 1
    %720 = vperm.xlu0 %719, %v90
    %v721 = vpop.permute.xlu0 %720
    %723 = vset.pattern.permute.xlu0 1
    %724 = vperm.xlu0 %723, %v91
    %v725 = vpop.permute.xlu0 %724
    %727 = vset.pattern.permute.xlu0 1
    %728 = vperm.xlu0 %727, %v92
    %v729 = vpop.permute.xlu0 %728
    %731 = vset.pattern.permute.xlu0 1
    %732 = vperm.xlu0 %731, %v93
    %v733 = vpop.permute.xlu0 %732
    %735 = vset.pattern.permute.xlu0 1
    %736 = vperm.xlu0 %735, %v94
    %v737 = vpop.permute.xlu0 %736
    %v739 = vlaneseq
    %v740 = vshrl.u32 %v739, 7
    %v741 = vsub.s32 1, %v740
    %v742 = vrot.slane %v30, %v741
    %v743 = vmul.f32 %v485, %v742
    %v744 = vmul.f32 %v489, %v742
    %v745 = vmul.f32 %v493, %v742
    %v746 = vmul.f32 %v497, %v742
    %v747 = vmul.f32 %v501, %v742
    %v748 = vmul.f32 %v505, %v742
    %v749 = vmul.f32 %v509, %v742
    %v750 = vmul.f32 %v513, %v742
    %v751 = vmul.f32 %v517, %v742
    %v752 = vmul.f32 %v521, %v742
    %v753 = vmul.f32 %v525, %v742
    %v754 = vmul.f32 %v529, %v742
    %v755 = vmul.f32 %v533, %v742
    %v756 = vmul.f32 %v537, %v742
    %v757 = vmul.f32 %v541, %v742
    %v758 = vmul.f32 %v545, %v742
    %v759 = vmul.f32 %v549, %v742
    %v760 = vmul.f32 %v553, %v742
    %v761 = vmul.f32 %v557, %v742
    %v762 = vmul.f32 %v561, %v742
    %v763 = vmul.f32 %v565, %v742
    %v764 = vmul.f32 %v569, %v742
    %v765 = vmul.f32 %v573, %v742
    %v766 = vmul.f32 %v577, %v742
    %v767 = vmul.f32 %v581, %v742
    %v768 = vmul.f32 %v585, %v742
    %v769 = vmul.f32 %v589, %v742
    %v770 = vmul.f32 %v593, %v742
    %v771 = vmul.f32 %v597, %v742
    %v772 = vmul.f32 %v601, %v742
    %v773 = vmul.f32 %v605, %v742
    %v774 = vmul.f32 %v609, %v742
    %v775 = vmul.f32 %v613, %v742
    %v776 = vmul.f32 %v617, %v742
    %v777 = vmul.f32 %v621, %v742
    %v778 = vmul.f32 %v625, %v742
    %v779 = vmul.f32 %v629, %v742
    %v780 = vmul.f32 %v633, %v742
    %v781 = vmul.f32 %v637, %v742
    %v782 = vmul.f32 %v641, %v742
    %v783 = vmul.f32 %v645, %v742
    %v784 = vmul.f32 %v649, %v742
    %v785 = vmul.f32 %v653, %v742
    %v786 = vmul.f32 %v657, %v742
    %v787 = vmul.f32 %v661, %v742
    %v788 = vmul.f32 %v665, %v742
    %v789 = vmul.f32 %v669, %v742
    %v790 = vmul.f32 %v673, %v742
    %v791 = vmul.f32 %v677, %v742
    %v792 = vmul.f32 %v681, %v742
    %v793 = vmul.f32 %v685, %v742
    %v794 = vmul.f32 %v689, %v742
    %v795 = vmul.f32 %v693, %v742
    %v796 = vmul.f32 %v697, %v742
    %v797 = vmul.f32 %v701, %v742
    %v798 = vmul.f32 %v705, %v742
    %v799 = vmul.f32 %v709, %v742
    %v800 = vmul.f32 %v713, %v742
    %v801 = vmul.f32 %v717, %v742
    %v802 = vmul.f32 %v721, %v742
    %v803 = vmul.f32 %v725, %v742
    %v804 = vmul.f32 %v729, %v742
    %v805 = vmul.f32 %v733, %v742
    %v806 = vmul.f32 %v737, %v742
    %v807 = vadd.f32 %v419, %v743
    %v808 = vadd.f32 %v420, %v744
    %v809 = vadd.f32 %v421, %v745
    %v810 = vadd.f32 %v422, %v746
    %v811 = vadd.f32 %v423, %v747
    %v812 = vadd.f32 %v424, %v748
    %v813 = vadd.f32 %v425, %v749
    %v814 = vadd.f32 %v426, %v750
    %v815 = vadd.f32 %v427, %v751
    %v816 = vadd.f32 %v428, %v752
    %v817 = vadd.f32 %v429, %v753
    %v818 = vadd.f32 %v430, %v754
    %v819 = vadd.f32 %v431, %v755
    %v820 = vadd.f32 %v432, %v756
    %v821 = vadd.f32 %v433, %v757
    %v822 = vadd.f32 %v434, %v758
    %v823 = vadd.f32 %v435, %v759
    %v824 = vadd.f32 %v436, %v760
    %v825 = vadd.f32 %v437, %v761
    %v826 = vadd.f32 %v438, %v762
    %v827 = vadd.f32 %v439, %v763
    %v828 = vadd.f32 %v440, %v764
    %v829 = vadd.f32 %v441, %v765
    %v830 = vadd.f32 %v442, %v766
    %v831 = vadd.f32 %v443, %v767
    %v832 = vadd.f32 %v444, %v768
    %v833 = vadd.f32 %v445, %v769
    %v834 = vadd.f32 %v446, %v770
    %v835 = vadd.f32 %v447, %v771
    %v836 = vadd.f32 %v448, %v772
    %v837 = vadd.f32 %v449, %v773
    %v838 = vadd.f32 %v450, %v774
    %v839 = vadd.f32 %v451, %v775
    %v840 = vadd.f32 %v452, %v776
    %v841 = vadd.f32 %v453, %v777
    %v842 = vadd.f32 %v454, %v778
    %v843 = vadd.f32 %v455, %v779
    %v844 = vadd.f32 %v456, %v780
    %v845 = vadd.f32 %v457, %v781
    %v846 = vadd.f32 %v458, %v782
    %v847 = vadd.f32 %v459, %v783
    %v848 = vadd.f32 %v460, %v784
    %v849 = vadd.f32 %v461, %v785
    %v850 = vadd.f32 %v462, %v786
    %v851 = vadd.f32 %v463, %v787
    %v852 = vadd.f32 %v464, %v788
    %v853 = vadd.f32 %v465, %v789
    %v854 = vadd.f32 %v466, %v790
    %v855 = vadd.f32 %v467, %v791
    %v856 = vadd.f32 %v468, %v792
    %v857 = vadd.f32 %v469, %v793
    %v858 = vadd.f32 %v470, %v794
    %v859 = vadd.f32 %v471, %v795
    %v860 = vadd.f32 %v472, %v796
    %v861 = vadd.f32 %v473, %v797
    %v862 = vadd.f32 %v474, %v798
    %v863 = vadd.f32 %v475, %v799
    %v864 = vadd.f32 %v476, %v800
    %v865 = vadd.f32 %v477, %v801
    %v866 = vadd.f32 %v478, %v802
    %v867 = vadd.f32 %v479, %v803
    %v868 = vadd.f32 %v480, %v804
    %v869 = vadd.f32 %v481, %v805
    %v870 = vadd.f32 %v482, %v806
    %871 = vset.pattern.permute.xlu0 2
    %872 = vperm.xlu0 %871, %v31
    %v873 = vpop.permute.xlu0 %872
    %875 = vset.pattern.permute.xlu0 2
    %876 = vperm.xlu0 %875, %v32
    %v877 = vpop.permute.xlu0 %876
    %879 = vset.pattern.permute.xlu0 2
    %880 = vperm.xlu0 %879, %v33
    %v881 = vpop.permute.xlu0 %880
    %883 = vset.pattern.permute.xlu0 2
    %884 = vperm.xlu0 %883, %v34
    %v885 = vpop.permute.xlu0 %884
    %887 = vset.pattern.permute.xlu0 2
    %888 = vperm.xlu0 %887, %v35
    %v889 = vpop.permute.xlu0 %888
    %891 = vset.pattern.permute.xlu0 2
    %892 = vperm.xlu0 %891, %v36
    %v893 = vpop.permute.xlu0 %892
    %895 = vset.pattern.permute.xlu0 2
    %896 = vperm.xlu0 %895, %v37
    %v897 = vpop.permute.xlu0 %896
    %899 = vset.pattern.permute.xlu0 2
    %900 = vperm.xlu0 %899, %v38
    %v901 = vpop.permute.xlu0 %900
    %903 = vset.pattern.permute.xlu0 2
    %904 = vperm.xlu0 %903, %v39
    %v905 = vpop.permute.xlu0 %904
    %907 = vset.pattern.permute.xlu0 2
    %908 = vperm.xlu0 %907, %v40
    %v909 = vpop.permute.xlu0 %908
    %911 = vset.pattern.permute.xlu0 2
    %912 = vperm.xlu0 %911, %v41
    %v913 = vpop.permute.xlu0 %912
    %915 = vset.pattern.permute.xlu0 2
    %916 = vperm.xlu0 %915, %v42
    %v917 = vpop.permute.xlu0 %916
    %919 = vset.pattern.permute.xlu0 2
    %920 = vperm.xlu0 %919, %v43
    %v921 = vpop.permute.xlu0 %920
    %923 = vset.pattern.permute.xlu0 2
    %924 = vperm.xlu0 %923, %v44
    %v925 = vpop.permute.xlu0 %924
    %927 = vset.pattern.permute.xlu0 2
    %928 = vperm.xlu0 %927, %v45
    %v929 = vpop.permute.xlu0 %928
    %931 = vset.pattern.permute.xlu0 2
    %932 = vperm.xlu0 %931, %v46
    %v933 = vpop.permute.xlu0 %932
    %935 = vset.pattern.permute.xlu0 2
    %936 = vperm.xlu0 %935, %v47
    %v937 = vpop.permute.xlu0 %936
    %939 = vset.pattern.permute.xlu0 2
    %940 = vperm.xlu0 %939, %v48
    %v941 = vpop.permute.xlu0 %940
    %943 = vset.pattern.permute.xlu0 2
    %944 = vperm.xlu0 %943, %v49
    %v945 = vpop.permute.xlu0 %944
    %947 = vset.pattern.permute.xlu0 2
    %948 = vperm.xlu0 %947, %v50
    %v949 = vpop.permute.xlu0 %948
    %951 = vset.pattern.permute.xlu0 2
    %952 = vperm.xlu0 %951, %v51
    %v953 = vpop.permute.xlu0 %952
    %955 = vset.pattern.permute.xlu0 2
    %956 = vperm.xlu0 %955, %v52
    %v957 = vpop.permute.xlu0 %956
    %959 = vset.pattern.permute.xlu0 2
    %960 = vperm.xlu0 %959, %v53
    %v961 = vpop.permute.xlu0 %960
    %963 = vset.pattern.permute.xlu0 2
    %964 = vperm.xlu0 %963, %v54
    %v965 = vpop.permute.xlu0 %964
    %967 = vset.pattern.permute.xlu0 2
    %968 = vperm.xlu0 %967, %v55
    %v969 = vpop.permute.xlu0 %968
    %971 = vset.pattern.permute.xlu0 2
    %972 = vperm.xlu0 %971, %v56
    %v973 = vpop.permute.xlu0 %972
    %975 = vset.pattern.permute.xlu0 2
    %976 = vperm.xlu0 %975, %v57
    %v977 = vpop.permute.xlu0 %976
    %979 = vset.pattern.permute.xlu0 2
    %980 = vperm.xlu0 %979, %v58
    %v981 = vpop.permute.xlu0 %980
    %983 = vset.pattern.permute.xlu0 2
    %984 = vperm.xlu0 %983, %v59
    %v985 = vpop.permute.xlu0 %984
    %987 = vset.pattern.permute.xlu0 2
    %988 = vperm.xlu0 %987, %v60
    %v989 = vpop.permute.xlu0 %988
    %991 = vset.pattern.permute.xlu0 2
    %992 = vperm.xlu0 %991, %v61
    %v993 = vpop.permute.xlu0 %992
    %995 = vset.pattern.permute.xlu0 2
    %996 = vperm.xlu0 %995, %v62
    %v997 = vpop.permute.xlu0 %996
    %999 = vset.pattern.permute.xlu0 2
    %1000 = vperm.xlu0 %999, %v63
    %v1001 = vpop.permute.xlu0 %1000
    %1003 = vset.pattern.permute.xlu0 2
    %1004 = vperm.xlu0 %1003, %v64
    %v1005 = vpop.permute.xlu0 %1004
    %1007 = vset.pattern.permute.xlu0 2
    %1008 = vperm.xlu0 %1007, %v65
    %v1009 = vpop.permute.xlu0 %1008
    %1011 = vset.pattern.permute.xlu0 2
    %1012 = vperm.xlu0 %1011, %v66
    %v1013 = vpop.permute.xlu0 %1012
    %1015 = vset.pattern.permute.xlu0 2
    %1016 = vperm.xlu0 %1015, %v67
    %v1017 = vpop.permute.xlu0 %1016
    %1019 = vset.pattern.permute.xlu0 2
    %1020 = vperm.xlu0 %1019, %v68
    %v1021 = vpop.permute.xlu0 %1020
    %1023 = vset.pattern.permute.xlu0 2
    %1024 = vperm.xlu0 %1023, %v69
    %v1025 = vpop.permute.xlu0 %1024
    %1027 = vset.pattern.permute.xlu0 2
    %1028 = vperm.xlu0 %1027, %v70
    %v1029 = vpop.permute.xlu0 %1028
    %1031 = vset.pattern.permute.xlu0 2
    %1032 = vperm.xlu0 %1031, %v71
    %v1033 = vpop.permute.xlu0 %1032
    %1035 = vset.pattern.permute.xlu0 2
    %1036 = vperm.xlu0 %1035, %v72
    %v1037 = vpop.permute.xlu0 %1036
    %1039 = vset.pattern.permute.xlu0 2
    %1040 = vperm.xlu0 %1039, %v73
    %v1041 = vpop.permute.xlu0 %1040
    %1043 = vset.pattern.permute.xlu0 2
    %1044 = vperm.xlu0 %1043, %v74
    %v1045 = vpop.permute.xlu0 %1044
    %1047 = vset.pattern.permute.xlu0 2
    %1048 = vperm.xlu0 %1047, %v75
    %v1049 = vpop.permute.xlu0 %1048
    %1051 = vset.pattern.permute.xlu0 2
    %1052 = vperm.xlu0 %1051, %v76
    %v1053 = vpop.permute.xlu0 %1052
    %1055 = vset.pattern.permute.xlu0 2
    %1056 = vperm.xlu0 %1055, %v77
    %v1057 = vpop.permute.xlu0 %1056
    %1059 = vset.pattern.permute.xlu0 2
    %1060 = vperm.xlu0 %1059, %v78
    %v1061 = vpop.permute.xlu0 %1060
    %1063 = vset.pattern.permute.xlu0 2
    %1064 = vperm.xlu0 %1063, %v79
    %v1065 = vpop.permute.xlu0 %1064
    %1067 = vset.pattern.permute.xlu0 2
    %1068 = vperm.xlu0 %1067, %v80
    %v1069 = vpop.permute.xlu0 %1068
    %1071 = vset.pattern.permute.xlu0 2
    %1072 = vperm.xlu0 %1071, %v81
    %v1073 = vpop.permute.xlu0 %1072
    %1075 = vset.pattern.permute.xlu0 2
    %1076 = vperm.xlu0 %1075, %v82
    %v1077 = vpop.permute.xlu0 %1076
    %1079 = vset.pattern.permute.xlu0 2
    %1080 = vperm.xlu0 %1079, %v83
    %v1081 = vpop.permute.xlu0 %1080
    %1083 = vset.pattern.permute.xlu0 2
    %1084 = vperm.xlu0 %1083, %v84
    %v1085 = vpop.permute.xlu0 %1084
    %1087 = vset.pattern.permute.xlu0 2
    %1088 = vperm.xlu0 %1087, %v85
    %v1089 = vpop.permute.xlu0 %1088
    %1091 = vset.pattern.permute.xlu0 2
    %1092 = vperm.xlu0 %1091, %v86
    %v1093 = vpop.permute.xlu0 %1092
    %1095 = vset.pattern.permute.xlu0 2
    %1096 = vperm.xlu0 %1095, %v87
    %v1097 = vpop.permute.xlu0 %1096
    %1099 = vset.pattern.permute.xlu0 2
    %1100 = vperm.xlu0 %1099, %v88
    %v1101 = vpop.permute.xlu0 %1100
    %1103 = vset.pattern.permute.xlu0 2
    %1104 = vperm.xlu0 %1103, %v89
    %v1105 = vpop.permute.xlu0 %1104
    %1107 = vset.pattern.permute.xlu0 2
    %1108 = vperm.xlu0 %1107, %v90
    %v1109 = vpop.permute.xlu0 %1108
    %1111 = vset.pattern.permute.xlu0 2
    %1112 = vperm.xlu0 %1111, %v91
    %v1113 = vpop.permute.xlu0 %1112
    %1115 = vset.pattern.permute.xlu0 2
    %1116 = vperm.xlu0 %1115, %v92
    %v1117 = vpop.permute.xlu0 %1116
    %1119 = vset.pattern.permute.xlu0 2
    %1120 = vperm.xlu0 %1119, %v93
    %v1121 = vpop.permute.xlu0 %1120
    %1123 = vset.pattern.permute.xlu0 2
    %1124 = vperm.xlu0 %1123, %v94
    %v1125 = vpop.permute.xlu0 %1124
    %v1127 = vlaneseq
    %v1128 = vshrl.u32 %v1127, 7
    %v1129 = vsub.s32 2, %v1128
    %v1130 = vrot.slane %v30, %v1129
    %v1131 = vmul.f32 %v873, %v1130
    %v1132 = vmul.f32 %v877, %v1130
    %v1133 = vmul.f32 %v881, %v1130
    %v1134 = vmul.f32 %v885, %v1130
    %v1135 = vmul.f32 %v889, %v1130
    %v1136 = vmul.f32 %v893, %v1130
    %v1137 = vmul.f32 %v897, %v1130
    %v1138 = vmul.f32 %v901, %v1130
    %v1139 = vmul.f32 %v905, %v1130
    %v1140 = vmul.f32 %v909, %v1130
    %v1141 = vmul.f32 %v913, %v1130
    %v1142 = vmul.f32 %v917, %v1130
    %v1143 = vmul.f32 %v921, %v1130
    %v1144 = vmul.f32 %v925, %v1130
    %v1145 = vmul.f32 %v929, %v1130
    %v1146 = vmul.f32 %v933, %v1130
    %v1147 = vmul.f32 %v937, %v1130
    %v1148 = vmul.f32 %v941, %v1130
    %v1149 = vmul.f32 %v945, %v1130
    %v1150 = vmul.f32 %v949, %v1130
    %v1151 = vmul.f32 %v953, %v1130
    %v1152 = vmul.f32 %v957, %v1130
    %v1153 = vmul.f32 %v961, %v1130
    %v1154 = vmul.f32 %v965, %v1130
    %v1155 = vmul.f32 %v969, %v1130
    %v1156 = vmul.f32 %v973, %v1130
    %v1157 = vmul.f32 %v977, %v1130
    %v1158 = vmul.f32 %v981, %v1130
    %v1159 = vmul.f32 %v985, %v1130
    %v1160 = vmul.f32 %v989, %v1130
    %v1161 = vmul.f32 %v993, %v1130
    %v1162 = vmul.f32 %v997, %v1130
    %v1163 = vmul.f32 %v1001, %v1130
    %v1164 = vmul.f32 %v1005, %v1130
    %v1165 = vmul.f32 %v1009, %v1130
    %v1166 = vmul.f32 %v1013, %v1130
    %v1167 = vmul.f32 %v1017, %v1130
    %v1168 = vmul.f32 %v1021, %v1130
    %v1169 = vmul.f32 %v1025, %v1130
    %v1170 = vmul.f32 %v1029, %v1130
    %v1171 = vmul.f32 %v1033, %v1130
    %v1172 = vmul.f32 %v1037, %v1130
    %v1173 = vmul.f32 %v1041, %v1130
    %v1174 = vmul.f32 %v1045, %v1130
    %v1175 = vmul.f32 %v1049, %v1130
    %v1176 = vmul.f32 %v1053, %v1130
    %v1177 = vmul.f32 %v1057, %v1130
    %v1178 = vmul.f32 %v1061, %v1130
    %v1179 = vmul.f32 %v1065, %v1130
    %v1180 = vmul.f32 %v1069, %v1130
    %v1181 = vmul.f32 %v1073, %v1130
    %v1182 = vmul.f32 %v1077, %v1130
    %v1183 = vmul.f32 %v1081, %v1130
    %v1184 = vmul.f32 %v1085, %v1130
    %v1185 = vmul.f32 %v1089, %v1130
    %v1186 = vmul.f32 %v1093, %v1130
    %v1187 = vmul.f32 %v1097, %v1130
    %v1188 = vmul.f32 %v1101, %v1130
    %v1189 = vmul.f32 %v1105, %v1130
    %v1190 = vmul.f32 %v1109, %v1130
    %v1191 = vmul.f32 %v1113, %v1130
    %v1192 = vmul.f32 %v1117, %v1130
    %v1193 = vmul.f32 %v1121, %v1130
    %v1194 = vmul.f32 %v1125, %v1130
    %v1195 = vadd.f32 %v807, %v1131
    %v1196 = vadd.f32 %v808, %v1132
    %v1197 = vadd.f32 %v809, %v1133
    %v1198 = vadd.f32 %v810, %v1134
    %v1199 = vadd.f32 %v811, %v1135
    %v1200 = vadd.f32 %v812, %v1136
    %v1201 = vadd.f32 %v813, %v1137
    %v1202 = vadd.f32 %v814, %v1138
    %v1203 = vadd.f32 %v815, %v1139
    %v1204 = vadd.f32 %v816, %v1140
    %v1205 = vadd.f32 %v817, %v1141
    %v1206 = vadd.f32 %v818, %v1142
    %v1207 = vadd.f32 %v819, %v1143
    %v1208 = vadd.f32 %v820, %v1144
    %v1209 = vadd.f32 %v821, %v1145
    %v1210 = vadd.f32 %v822, %v1146
    %v1211 = vadd.f32 %v823, %v1147
    %v1212 = vadd.f32 %v824, %v1148
    %v1213 = vadd.f32 %v825, %v1149
    %v1214 = vadd.f32 %v826, %v1150
    %v1215 = vadd.f32 %v827, %v1151
    %v1216 = vadd.f32 %v828, %v1152
    %v1217 = vadd.f32 %v829, %v1153
    %v1218 = vadd.f32 %v830, %v1154
    %v1219 = vadd.f32 %v831, %v1155
    %v1220 = vadd.f32 %v832, %v1156
    %v1221 = vadd.f32 %v833, %v1157
    %v1222 = vadd.f32 %v834, %v1158
    %v1223 = vadd.f32 %v835, %v1159
    %v1224 = vadd.f32 %v836, %v1160
    %v1225 = vadd.f32 %v837, %v1161
    %v1226 = vadd.f32 %v838, %v1162
    %v1227 = vadd.f32 %v839, %v1163
    %v1228 = vadd.f32 %v840, %v1164
    %v1229 = vadd.f32 %v841, %v1165
    %v1230 = vadd.f32 %v842, %v1166
    %v1231 = vadd.f32 %v843, %v1167
    %v1232 = vadd.f32 %v844, %v1168
    %v1233 = vadd.f32 %v845, %v1169
    %v1234 = vadd.f32 %v846, %v1170
    %v1235 = vadd.f32 %v847, %v1171
    %v1236 = vadd.f32 %v848, %v1172
    %v1237 = vadd.f32 %v849, %v1173
    %v1238 = vadd.f32 %v850, %v1174
    %v1239 = vadd.f32 %v851, %v1175
    %v1240 = vadd.f32 %v852, %v1176
    %v1241 = vadd.f32 %v853, %v1177
    %v1242 = vadd.f32 %v854, %v1178
    %v1243 = vadd.f32 %v855, %v1179
    %v1244 = vadd.f32 %v856, %v1180
    %v1245 = vadd.f32 %v857, %v1181
    %v1246 = vadd.f32 %v858, %v1182
    %v1247 = vadd.f32 %v859, %v1183
    %v1248 = vadd.f32 %v860, %v1184
    %v1249 = vadd.f32 %v861, %v1185
    %v1250 = vadd.f32 %v862, %v1186
    %v1251 = vadd.f32 %v863, %v1187
    %v1252 = vadd.f32 %v864, %v1188
    %v1253 = vadd.f32 %v865, %v1189
    %v1254 = vadd.f32 %v866, %v1190
    %v1255 = vadd.f32 %v867, %v1191
    %v1256 = vadd.f32 %v868, %v1192
    %v1257 = vadd.f32 %v869, %v1193
    %v1258 = vadd.f32 %v870, %v1194
    %v1259 = vld [vmem:[%s2] sm:$0xff]
    %v1260 = vld [vmem:[%s2 + $0x8] sm:$0xff]
    %v1261 = vld [vmem:[%s2 + $0x10] sm:$0xff]
    %v1262 = vld [vmem:[%s2 + $0x18] sm:$0xff]
    %v1263 = vld [vmem:[%s2 + $0x20] sm:$0xff]
    %v1264 = vld [vmem:[%s2 + $0x28] sm:$0xff]
    %v1265 = vld [vmem:[%s2 + $0x30] sm:$0xff]
    %v1266 = vld [vmem:[%s2 + $0x38] sm:$0xff]
    %v1267 = vld [vmem:[%s2 + $0x40] sm:$0xff]
    %v1268 = vld [vmem:[%s2 + $0x48] sm:$0xff]
    %v1269 = vld [vmem:[%s2 + $0x50] sm:$0xff]
    %v1270 = vld [vmem:[%s2 + $0x58] sm:$0xff]
    %v1271 = vld [vmem:[%s2 + $0x60] sm:$0xff]
    %v1272 = vld [vmem:[%s2 + $0x68] sm:$0xff]
    %v1273 = vld [vmem:[%s2 + $0x70] sm:$0xff]
    %v1274 = vld [vmem:[%s2 + $0x78] sm:$0xff]
    %v1275 = vld [vmem:[%s2 + $0x80] sm:$0xff]
    %v1276 = vld [vmem:[%s2 + $0x88] sm:$0xff]
    %v1277 = vld [vmem:[%s2 + $0x90] sm:$0xff]
    %v1278 = vld [vmem:[%s2 + $0x98] sm:$0xff]
    %v1279 = vld [vmem:[%s2 + $0xa0] sm:$0xff]
    %v1280 = vld [vmem:[%s2 + $0xa8] sm:$0xff]
    %v1281 = vld [vmem:[%s2 + $0xb0] sm:$0xff]
    %v1282 = vld [vmem:[%s2 + $0xb8] sm:$0xff]
    %v1283 = vld [vmem:[%s2 + $0xc0] sm:$0xff]
    %v1284 = vld [vmem:[%s2 + $0xc8] sm:$0xff]
    %v1285 = vld [vmem:[%s2 + $0xd0] sm:$0xff]
    %v1286 = vld [vmem:[%s2 + $0xd8] sm:$0xff]
    %v1287 = vld [vmem:[%s2 + $0xe0] sm:$0xff]
    %v1288 = vld [vmem:[%s2 + $0xe8] sm:$0xff]
    %v1289 = vld [vmem:[%s2 + $0xf0] sm:$0xff]
    %v1290 = vld [vmem:[%s2 + $0xf8] sm:$0xff]
    %v1291 = vld [vmem:[%s2 + $0x100] sm:$0xff]
    %v1292 = vld [vmem:[%s2 + $0x108] sm:$0xff]
    %v1293 = vld [vmem:[%s2 + $0x110] sm:$0xff]
    %v1294 = vld [vmem:[%s2 + $0x118] sm:$0xff]
    %v1295 = vld [vmem:[%s2 + $0x120] sm:$0xff]
    %v1296 = vld [vmem:[%s2 + $0x128] sm:$0xff]
    %v1297 = vld [vmem:[%s2 + $0x130] sm:$0xff]
    %v1298 = vld [vmem:[%s2 + $0x138] sm:$0xff]
    %v1299 = vld [vmem:[%s2 + $0x140] sm:$0xff]
    %v1300 = vld [vmem:[%s2 + $0x148] sm:$0xff]
    %v1301 = vld [vmem:[%s2 + $0x150] sm:$0xff]
    %v1302 = vld [vmem:[%s2 + $0x158] sm:$0xff]
    %v1303 = vld [vmem:[%s2 + $0x160] sm:$0xff]
    %v1304 = vld [vmem:[%s2 + $0x168] sm:$0xff]
    %v1305 = vld [vmem:[%s2 + $0x170] sm:$0xff]
    %v1306 = vld [vmem:[%s2 + $0x178] sm:$0xff]
    %v1307 = vld [vmem:[%s2 + $0x180] sm:$0xff]
    %v1308 = vld [vmem:[%s2 + $0x188] sm:$0xff]
    %v1309 = vld [vmem:[%s2 + $0x190] sm:$0xff]
    %v1310 = vld [vmem:[%s2 + $0x198] sm:$0xff]
    %v1311 = vld [vmem:[%s2 + $0x1a0] sm:$0xff]
    %v1312 = vld [vmem:[%s2 + $0x1a8] sm:$0xff]
    %v1313 = vld [vmem:[%s2 + $0x1b0] sm:$0xff]
    %v1314 = vld [vmem:[%s2 + $0x1b8] sm:$0xff]
    %v1315 = vld [vmem:[%s2 + $0x1c0] sm:$0xff]
    %v1316 = vld [vmem:[%s2 + $0x1c8] sm:$0xff]
    %v1317 = vld [vmem:[%s2 + $0x1d0] sm:$0xff]
    %v1318 = vld [vmem:[%s2 + $0x1d8] sm:$0xff]
    %v1319 = vld [vmem:[%s2 + $0x1e0] sm:$0xff]
    %v1320 = vld [vmem:[%s2 + $0x1e8] sm:$0xff]
    %v1321 = vld [vmem:[%s2 + $0x1f0] sm:$0xff]
    %v1322 = vld [vmem:[%s2 + $0x1f8] sm:$0xff]
    %1324 = vset.pattern.permute.xlu0 0
    %1325 = vperm.xlu0 %1324, %v1259
    %v1326 = vpop.permute.xlu0 %1325
    %1329 = vset.pattern.permute.xlu0 0
    %1330 = vperm.xlu0 %1329, %v1260
    %v1331 = vpop.permute.xlu0 %1330
    %1334 = vset.pattern.permute.xlu0 0
    %1335 = vperm.xlu0 %1334, %v1261
    %v1336 = vpop.permute.xlu0 %1335
    %1339 = vset.pattern.permute.xlu0 0
    %1340 = vperm.xlu0 %1339, %v1262
    %v1341 = vpop.permute.xlu0 %1340
    %1344 = vset.pattern.permute.xlu0 0
    %1345 = vperm.xlu0 %1344, %v1263
    %v1346 = vpop.permute.xlu0 %1345
    %1349 = vset.pattern.permute.xlu0 0
    %1350 = vperm.xlu0 %1349, %v1264
    %v1351 = vpop.permute.xlu0 %1350
    %1354 = vset.pattern.permute.xlu0 0
    %1355 = vperm.xlu0 %1354, %v1265
    %v1356 = vpop.permute.xlu0 %1355
    %1359 = vset.pattern.permute.xlu0 0
    %1360 = vperm.xlu0 %1359, %v1266
    %v1361 = vpop.permute.xlu0 %1360
    %1364 = vset.pattern.permute.xlu0 0
    %1365 = vperm.xlu0 %1364, %v1267
    %v1366 = vpop.permute.xlu0 %1365
    %1369 = vset.pattern.permute.xlu0 0
    %1370 = vperm.xlu0 %1369, %v1268
    %v1371 = vpop.permute.xlu0 %1370
    %1374 = vset.pattern.permute.xlu0 0
    %1375 = vperm.xlu0 %1374, %v1269
    %v1376 = vpop.permute.xlu0 %1375
    %1379 = vset.pattern.permute.xlu0 0
    %1380 = vperm.xlu0 %1379, %v1270
    %v1381 = vpop.permute.xlu0 %1380
    %1384 = vset.pattern.permute.xlu0 0
    %1385 = vperm.xlu0 %1384, %v1271
    %v1386 = vpop.permute.xlu0 %1385
    %1389 = vset.pattern.permute.xlu0 0
    %1390 = vperm.xlu0 %1389, %v1272
    %v1391 = vpop.permute.xlu0 %1390
    %1394 = vset.pattern.permute.xlu0 0
    %1395 = vperm.xlu0 %1394, %v1273
    %v1396 = vpop.permute.xlu0 %1395
    %1399 = vset.pattern.permute.xlu0 0
    %1400 = vperm.xlu0 %1399, %v1274
    %v1401 = vpop.permute.xlu0 %1400
    %1404 = vset.pattern.permute.xlu0 0
    %1405 = vperm.xlu0 %1404, %v1275
    %v1406 = vpop.permute.xlu0 %1405
    %1409 = vset.pattern.permute.xlu0 0
    %1410 = vperm.xlu0 %1409, %v1276
    %v1411 = vpop.permute.xlu0 %1410
    %1414 = vset.pattern.permute.xlu0 0
    %1415 = vperm.xlu0 %1414, %v1277
    %v1416 = vpop.permute.xlu0 %1415
    %1419 = vset.pattern.permute.xlu0 0
    %1420 = vperm.xlu0 %1419, %v1278
    %v1421 = vpop.permute.xlu0 %1420
    %1424 = vset.pattern.permute.xlu0 0
    %1425 = vperm.xlu0 %1424, %v1279
    %v1426 = vpop.permute.xlu0 %1425
    %1429 = vset.pattern.permute.xlu0 0
    %1430 = vperm.xlu0 %1429, %v1280
    %v1431 = vpop.permute.xlu0 %1430
    %1434 = vset.pattern.permute.xlu0 0
    %1435 = vperm.xlu0 %1434, %v1281
    %v1436 = vpop.permute.xlu0 %1435
    %1439 = vset.pattern.permute.xlu0 0
    %1440 = vperm.xlu0 %1439, %v1282
    %v1441 = vpop.permute.xlu0 %1440
    %1444 = vset.pattern.permute.xlu0 0
    %1445 = vperm.xlu0 %1444, %v1283
    %v1446 = vpop.permute.xlu0 %1445
    %1449 = vset.pattern.permute.xlu0 0
    %1450 = vperm.xlu0 %1449, %v1284
    %v1451 = vpop.permute.xlu0 %1450
    %1454 = vset.pattern.permute.xlu0 0
    %1455 = vperm.xlu0 %1454, %v1285
    %v1456 = vpop.permute.xlu0 %1455
    %1459 = vset.pattern.permute.xlu0 0
    %1460 = vperm.xlu0 %1459, %v1286
    %v1461 = vpop.permute.xlu0 %1460
    %1464 = vset.pattern.permute.xlu0 0
    %1465 = vperm.xlu0 %1464, %v1287
    %v1466 = vpop.permute.xlu0 %1465
    %1469 = vset.pattern.permute.xlu0 0
    %1470 = vperm.xlu0 %1469, %v1288
    %v1471 = vpop.permute.xlu0 %1470
    %1474 = vset.pattern.permute.xlu0 0
    %1475 = vperm.xlu0 %1474, %v1289
    %v1476 = vpop.permute.xlu0 %1475
    %1479 = vset.pattern.permute.xlu0 0
    %1480 = vperm.xlu0 %1479, %v1290
    %v1481 = vpop.permute.xlu0 %1480
    %1484 = vset.pattern.permute.xlu0 0
    %1485 = vperm.xlu0 %1484, %v1291
    %v1486 = vpop.permute.xlu0 %1485
    %1489 = vset.pattern.permute.xlu0 0
    %1490 = vperm.xlu0 %1489, %v1292
    %v1491 = vpop.permute.xlu0 %1490
    %1494 = vset.pattern.permute.xlu0 0
    %1495 = vperm.xlu0 %1494, %v1293
    %v1496 = vpop.permute.xlu0 %1495
    %1499 = vset.pattern.permute.xlu0 0
    %1500 = vperm.xlu0 %1499, %v1294
    %v1501 = vpop.permute.xlu0 %1500
    %1504 = vset.pattern.permute.xlu0 0
    %1505 = vperm.xlu0 %1504, %v1295
    %v1506 = vpop.permute.xlu0 %1505
    %1509 = vset.pattern.permute.xlu0 0
    %1510 = vperm.xlu0 %1509, %v1296
    %v1511 = vpop.permute.xlu0 %1510
    %1514 = vset.pattern.permute.xlu0 0
    %1515 = vperm.xlu0 %1514, %v1297
    %v1516 = vpop.permute.xlu0 %1515
    %1519 = vset.pattern.permute.xlu0 0
    %1520 = vperm.xlu0 %1519, %v1298
    %v1521 = vpop.permute.xlu0 %1520
    %1524 = vset.pattern.permute.xlu0 0
    %1525 = vperm.xlu0 %1524, %v1299
    %v1526 = vpop.permute.xlu0 %1525
    %1529 = vset.pattern.permute.xlu0 0
    %1530 = vperm.xlu0 %1529, %v1300
    %v1531 = vpop.permute.xlu0 %1530
    %1534 = vset.pattern.permute.xlu0 0
    %1535 = vperm.xlu0 %1534, %v1301
    %v1536 = vpop.permute.xlu0 %1535
    %1539 = vset.pattern.permute.xlu0 0
    %1540 = vperm.xlu0 %1539, %v1302
    %v1541 = vpop.permute.xlu0 %1540
    %1544 = vset.pattern.permute.xlu0 0
    %1545 = vperm.xlu0 %1544, %v1303
    %v1546 = vpop.permute.xlu0 %1545
    %1549 = vset.pattern.permute.xlu0 0
    %1550 = vperm.xlu0 %1549, %v1304
    %v1551 = vpop.permute.xlu0 %1550
    %1554 = vset.pattern.permute.xlu0 0
    %1555 = vperm.xlu0 %1554, %v1305
    %v1556 = vpop.permute.xlu0 %1555
    %1559 = vset.pattern.permute.xlu0 0
    %1560 = vperm.xlu0 %1559, %v1306
    %v1561 = vpop.permute.xlu0 %1560
    %1564 = vset.pattern.permute.xlu0 0
    %1565 = vperm.xlu0 %1564, %v1307
    %v1566 = vpop.permute.xlu0 %1565
    %1569 = vset.pattern.permute.xlu0 0
    %1570 = vperm.xlu0 %1569, %v1308
    %v1571 = vpop.permute.xlu0 %1570
    %1574 = vset.pattern.permute.xlu0 0
    %1575 = vperm.xlu0 %1574, %v1309
    %v1576 = vpop.permute.xlu0 %1575
    %1579 = vset.pattern.permute.xlu0 0
    %1580 = vperm.xlu0 %1579, %v1310
    %v1581 = vpop.permute.xlu0 %1580
    %1584 = vset.pattern.permute.xlu0 0
    %1585 = vperm.xlu0 %1584, %v1311
    %v1586 = vpop.permute.xlu0 %1585
    %1589 = vset.pattern.permute.xlu0 0
    %1590 = vperm.xlu0 %1589, %v1312
    %v1591 = vpop.permute.xlu0 %1590
    %1594 = vset.pattern.permute.xlu0 0
    %1595 = vperm.xlu0 %1594, %v1313
    %v1596 = vpop.permute.xlu0 %1595
    %1599 = vset.pattern.permute.xlu0 0
    %1600 = vperm.xlu0 %1599, %v1314
    %v1601 = vpop.permute.xlu0 %1600
    %1604 = vset.pattern.permute.xlu0 0
    %1605 = vperm.xlu0 %1604, %v1315
    %v1606 = vpop.permute.xlu0 %1605
    %1609 = vset.pattern.permute.xlu0 0
    %1610 = vperm.xlu0 %1609, %v1316
    %v1611 = vpop.permute.xlu0 %1610
    %1614 = vset.pattern.permute.xlu0 0
    %1615 = vperm.xlu0 %1614, %v1317
    %v1616 = vpop.permute.xlu0 %1615
    %1619 = vset.pattern.permute.xlu0 0
    %1620 = vperm.xlu0 %1619, %v1318
    %v1621 = vpop.permute.xlu0 %1620
    %1624 = vset.pattern.permute.xlu0 0
    %1625 = vperm.xlu0 %1624, %v1319
    %v1626 = vpop.permute.xlu0 %1625
    %1629 = vset.pattern.permute.xlu0 0
    %1630 = vperm.xlu0 %1629, %v1320
    %v1631 = vpop.permute.xlu0 %1630
    %1634 = vset.pattern.permute.xlu0 0
    %1635 = vperm.xlu0 %1634, %v1321
    %v1636 = vpop.permute.xlu0 %1635
    %1639 = vset.pattern.permute.xlu0 0
    %1640 = vperm.xlu0 %1639, %v1322
    %v1641 = vpop.permute.xlu0 %1640
    %v1643 = vadd.f32 %v1195, %v1326
    %v1644 = vadd.f32 %v1196, %v1331
    %v1645 = vadd.f32 %v1197, %v1336
    %v1646 = vadd.f32 %v1198, %v1341
    %v1647 = vadd.f32 %v1199, %v1346
    %v1648 = vadd.f32 %v1200, %v1351
    %v1649 = vadd.f32 %v1201, %v1356
    %v1650 = vadd.f32 %v1202, %v1361
    %v1651 = vadd.f32 %v1203, %v1366
    %v1652 = vadd.f32 %v1204, %v1371
    %v1653 = vadd.f32 %v1205, %v1376
    %v1654 = vadd.f32 %v1206, %v1381
    %v1655 = vadd.f32 %v1207, %v1386
    %v1656 = vadd.f32 %v1208, %v1391
    %v1657 = vadd.f32 %v1209, %v1396
    %v1658 = vadd.f32 %v1210, %v1401
    %v1659 = vadd.f32 %v1211, %v1406
    %v1660 = vadd.f32 %v1212, %v1411
    %v1661 = vadd.f32 %v1213, %v1416
    %v1662 = vadd.f32 %v1214, %v1421
    %v1663 = vadd.f32 %v1215, %v1426
    %v1664 = vadd.f32 %v1216, %v1431
    %v1665 = vadd.f32 %v1217, %v1436
    %v1666 = vadd.f32 %v1218, %v1441
    %v1667 = vadd.f32 %v1219, %v1446
    %v1668 = vadd.f32 %v1220, %v1451
    %v1669 = vadd.f32 %v1221, %v1456
    %v1670 = vadd.f32 %v1222, %v1461
    %v1671 = vadd.f32 %v1223, %v1466
    %v1672 = vadd.f32 %v1224, %v1471
    %v1673 = vadd.f32 %v1225, %v1476
    %v1674 = vadd.f32 %v1226, %v1481
    %v1675 = vadd.f32 %v1227, %v1486
    %v1676 = vadd.f32 %v1228, %v1491
    %v1677 = vadd.f32 %v1229, %v1496
    %v1678 = vadd.f32 %v1230, %v1501
    %v1679 = vadd.f32 %v1231, %v1506
    %v1680 = vadd.f32 %v1232, %v1511
    %v1681 = vadd.f32 %v1233, %v1516
    %v1682 = vadd.f32 %v1234, %v1521
    %v1683 = vadd.f32 %v1235, %v1526
    %v1684 = vadd.f32 %v1236, %v1531
    %v1685 = vadd.f32 %v1237, %v1536
    %v1686 = vadd.f32 %v1238, %v1541
    %v1687 = vadd.f32 %v1239, %v1546
    %v1688 = vadd.f32 %v1240, %v1551
    %v1689 = vadd.f32 %v1241, %v1556
    %v1690 = vadd.f32 %v1242, %v1561
    %v1691 = vadd.f32 %v1243, %v1566
    %v1692 = vadd.f32 %v1244, %v1571
    %v1693 = vadd.f32 %v1245, %v1576
    %v1694 = vadd.f32 %v1246, %v1581
    %v1695 = vadd.f32 %v1247, %v1586
    %v1696 = vadd.f32 %v1248, %v1591
    %v1697 = vadd.f32 %v1249, %v1596
    %v1698 = vadd.f32 %v1250, %v1601
    %v1699 = vadd.f32 %v1251, %v1606
    %v1700 = vadd.f32 %v1252, %v1611
    %v1701 = vadd.f32 %v1253, %v1616
    %v1702 = vadd.f32 %v1254, %v1621
    %v1703 = vadd.f32 %v1255, %v1626
    %v1704 = vadd.f32 %v1256, %v1631
    %v1705 = vadd.f32 %v1257, %v1636
    %v1706 = vadd.f32 %v1258, %v1641
    %v1707 = vmax.f32 %v1643, 0.0
    %v1708 = vmax.f32 %v1644, 0.0
    %v1709 = vmax.f32 %v1645, 0.0
    %v1710 = vmax.f32 %v1646, 0.0
    %v1711 = vmax.f32 %v1647, 0.0
    %v1712 = vmax.f32 %v1648, 0.0
    %v1713 = vmax.f32 %v1649, 0.0
    %v1714 = vmax.f32 %v1650, 0.0
    %v1715 = vmax.f32 %v1651, 0.0
    %v1716 = vmax.f32 %v1652, 0.0
    %v1717 = vmax.f32 %v1653, 0.0
    %v1718 = vmax.f32 %v1654, 0.0
    %v1719 = vmax.f32 %v1655, 0.0
    %v1720 = vmax.f32 %v1656, 0.0
    %v1721 = vmax.f32 %v1657, 0.0
    %v1722 = vmax.f32 %v1658, 0.0
    %v1723 = vmax.f32 %v1659, 0.0
    %v1724 = vmax.f32 %v1660, 0.0
    %v1725 = vmax.f32 %v1661, 0.0
    %v1726 = vmax.f32 %v1662, 0.0
    %v1727 = vmax.f32 %v1663, 0.0
    %v1728 = vmax.f32 %v1664, 0.0
    %v1729 = vmax.f32 %v1665, 0.0
    %v1730 = vmax.f32 %v1666, 0.0
    %v1731 = vmax.f32 %v1667, 0.0
    %v1732 = vmax.f32 %v1668, 0.0
    %v1733 = vmax.f32 %v1669, 0.0
    %v1734 = vmax.f32 %v1670, 0.0
    %v1735 = vmax.f32 %v1671, 0.0
    %v1736 = vmax.f32 %v1672, 0.0
    %v1737 = vmax.f32 %v1673, 0.0
    %v1738 = vmax.f32 %v1674, 0.0
    %v1739 = vmax.f32 %v1675, 0.0
    %v1740 = vmax.f32 %v1676, 0.0
    %v1741 = vmax.f32 %v1677, 0.0
    %v1742 = vmax.f32 %v1678, 0.0
    %v1743 = vmax.f32 %v1679, 0.0
    %v1744 = vmax.f32 %v1680, 0.0
    %v1745 = vmax.f32 %v1681, 0.0
    %v1746 = vmax.f32 %v1682, 0.0
    %v1747 = vmax.f32 %v1683, 0.0
    %v1748 = vmax.f32 %v1684, 0.0
    %v1749 = vmax.f32 %v1685, 0.0
    %v1750 = vmax.f32 %v1686, 0.0
    %v1751 = vmax.f32 %v1687, 0.0
    %v1752 = vmax.f32 %v1688, 0.0
    %v1753 = vmax.f32 %v1689, 0.0
    %v1754 = vmax.f32 %v1690, 0.0
    %v1755 = vmax.f32 %v1691, 0.0
    %v1756 = vmax.f32 %v1692, 0.0
    %v1757 = vmax.f32 %v1693, 0.0
    %v1758 = vmax.f32 %v1694, 0.0
    %v1759 = vmax.f32 %v1695, 0.0
    %v1760 = vmax.f32 %v1696, 0.0
    %v1761 = vmax.f32 %v1697, 0.0
    %v1762 = vmax.f32 %v1698, 0.0
    %v1763 = vmax.f32 %v1699, 0.0
    %v1764 = vmax.f32 %v1700, 0.0
    %v1765 = vmax.f32 %v1701, 0.0
    %v1766 = vmax.f32 %v1702, 0.0
    %v1767 = vmax.f32 %v1703, 0.0
    %v1768 = vmax.f32 %v1704, 0.0
    %v1769 = vmax.f32 %v1705, 0.0
    %v1770 = vmax.f32 %v1706, 0.0
    %v1771 = vld [vmem:[%s3] sm:$0xff]
    %v1772 = vld [vmem:[%s3 + $0x8] sm:$0xff]
    %v1773 = vld [vmem:[%s3 + $0x10] sm:$0xff]
    %v1774 = vld [vmem:[%s3 + $0x18] sm:$0xff]
    %v1775 = vld [vmem:[%s3 + $0x20] sm:$0xff]
    %v1776 = vld [vmem:[%s3 + $0x28] sm:$0xff]
    %v1777 = vld [vmem:[%s3 + $0x30] sm:$0xff]
    %v1778 = vld [vmem:[%s3 + $0x38] sm:$0xff]
    %v1779 = vld [vmem:[%s3 + $0x40] sm:$0xff]
    %v1780 = vld [vmem:[%s3 + $0x48] sm:$0xff]
    %v1781 = vld [vmem:[%s3 + $0x50] sm:$0xff]
    %v1782 = vld [vmem:[%s3 + $0x58] sm:$0xff]
    %v1783 = vld [vmem:[%s3 + $0x60] sm:$0xff]
    %v1784 = vld [vmem:[%s3 + $0x68] sm:$0xff]
    %v1785 = vld [vmem:[%s3 + $0x70] sm:$0xff]
    %v1786 = vld [vmem:[%s3 + $0x78] sm:$0xff]
    %v1787 = vld [vmem:[%s3 + $0x80] sm:$0xff]
    %v1788 = vld [vmem:[%s3 + $0x88] sm:$0xff]
    %v1789 = vld [vmem:[%s3 + $0x90] sm:$0xff]
    %v1790 = vld [vmem:[%s3 + $0x98] sm:$0xff]
    %v1791 = vld [vmem:[%s3 + $0xa0] sm:$0xff]
    %v1792 = vld [vmem:[%s3 + $0xa8] sm:$0xff]
    %v1793 = vld [vmem:[%s3 + $0xb0] sm:$0xff]
    %v1794 = vld [vmem:[%s3 + $0xb8] sm:$0xff]
    %v1795 = vld [vmem:[%s3 + $0xc0] sm:$0xff]
    %v1796 = vld [vmem:[%s3 + $0xc8] sm:$0xff]
    %v1797 = vld [vmem:[%s3 + $0xd0] sm:$0xff]
    %v1798 = vld [vmem:[%s3 + $0xd8] sm:$0xff]
    %v1799 = vld [vmem:[%s3 + $0xe0] sm:$0xff]
    %v1800 = vld [vmem:[%s3 + $0xe8] sm:$0xff]
    %v1801 = vld [vmem:[%s3 + $0xf0] sm:$0xff]
    %v1802 = vld [vmem:[%s3 + $0xf8] sm:$0xff]
    %v1803 = vld [vmem:[%s3 + $0x100] sm:$0xff]
    %v1804 = vld [vmem:[%s3 + $0x108] sm:$0xff]
    %v1805 = vld [vmem:[%s3 + $0x110] sm:$0xff]
    %v1806 = vld [vmem:[%s3 + $0x118] sm:$0xff]
    %v1807 = vld [vmem:[%s3 + $0x120] sm:$0xff]
    %v1808 = vld [vmem:[%s3 + $0x128] sm:$0xff]
    %v1809 = vld [vmem:[%s3 + $0x130] sm:$0xff]
    %v1810 = vld [vmem:[%s3 + $0x138] sm:$0xff]
    %v1811 = vld [vmem:[%s3 + $0x140] sm:$0xff]
    %v1812 = vld [vmem:[%s3 + $0x148] sm:$0xff]
    %v1813 = vld [vmem:[%s3 + $0x150] sm:$0xff]
    %v1814 = vld [vmem:[%s3 + $0x158] sm:$0xff]
    %v1815 = vld [vmem:[%s3 + $0x160] sm:$0xff]
    %v1816 = vld [vmem:[%s3 + $0x168] sm:$0xff]
    %v1817 = vld [vmem:[%s3 + $0x170] sm:$0xff]
    %v1818 = vld [vmem:[%s3 + $0x178] sm:$0xff]
    %v1819 = vld [vmem:[%s3 + $0x180] sm:$0xff]
    %v1820 = vld [vmem:[%s3 + $0x188] sm:$0xff]
    %v1821 = vld [vmem:[%s3 + $0x190] sm:$0xff]
    %v1822 = vld [vmem:[%s3 + $0x198] sm:$0xff]
    %v1823 = vld [vmem:[%s3 + $0x1a0] sm:$0xff]
    %v1824 = vld [vmem:[%s3 + $0x1a8] sm:$0xff]
    %v1825 = vld [vmem:[%s3 + $0x1b0] sm:$0xff]
    %v1826 = vld [vmem:[%s3 + $0x1b8] sm:$0xff]
    %v1827 = vld [vmem:[%s3 + $0x1c0] sm:$0xff]
    %v1828 = vld [vmem:[%s3 + $0x1c8] sm:$0xff]
    %v1829 = vld [vmem:[%s3 + $0x1d0] sm:$0xff]
    %v1830 = vld [vmem:[%s3 + $0x1d8] sm:$0xff]
    %v1831 = vld [vmem:[%s3 + $0x1e0] sm:$0xff]
    %v1832 = vld [vmem:[%s3 + $0x1e8] sm:$0xff]
    %v1833 = vld [vmem:[%s3 + $0x1f0] sm:$0xff]
    %v1834 = vld [vmem:[%s3 + $0x1f8] sm:$0xff]
    %v1835 = vpack.c.bf16 %v1708, %v1707
    %v1836 = vpack.c.bf16 %v1710, %v1709
    %v1837 = vpack.c.bf16 %v1712, %v1711
    %v1838 = vpack.c.bf16 %v1714, %v1713
    %v1839 = vpack.c.bf16 %v1716, %v1715
    %v1840 = vpack.c.bf16 %v1718, %v1717
    %v1841 = vpack.c.bf16 %v1720, %v1719
    %v1842 = vpack.c.bf16 %v1722, %v1721
    %v1843 = vpack.c.bf16 %v1724, %v1723
    %v1844 = vpack.c.bf16 %v1726, %v1725
    %v1845 = vpack.c.bf16 %v1728, %v1727
    %v1846 = vpack.c.bf16 %v1730, %v1729
    %v1847 = vpack.c.bf16 %v1732, %v1731
    %v1848 = vpack.c.bf16 %v1734, %v1733
    %v1849 = vpack.c.bf16 %v1736, %v1735
    %v1850 = vpack.c.bf16 %v1738, %v1737
    %v1851 = vpack.c.bf16 %v1740, %v1739
    %v1852 = vpack.c.bf16 %v1742, %v1741
    %v1853 = vpack.c.bf16 %v1744, %v1743
    %v1854 = vpack.c.bf16 %v1746, %v1745
    %v1855 = vpack.c.bf16 %v1748, %v1747
    %v1856 = vpack.c.bf16 %v1750, %v1749
    %v1857 = vpack.c.bf16 %v1752, %v1751
    %v1858 = vpack.c.bf16 %v1754, %v1753
    %v1859 = vpack.c.bf16 %v1756, %v1755
    %v1860 = vpack.c.bf16 %v1758, %v1757
    %v1861 = vpack.c.bf16 %v1760, %v1759
    %v1862 = vpack.c.bf16 %v1762, %v1761
    %v1863 = vpack.c.bf16 %v1764, %v1763
    %v1864 = vpack.c.bf16 %v1766, %v1765
    %v1865 = vpack.c.bf16 %v1768, %v1767
    %v1866 = vpack.c.bf16 %v1770, %v1769
    %v1867 = vld [vmem:[%s4] sm:$0xff]
    %v1868 = vld [vmem:[%s4 + $0x8] sm:$0xff]
    %v1869 = vld [vmem:[%s4 + $0x10] sm:$0xff]
    %v1870 = vld [vmem:[%s4 + $0x18] sm:$0xff]
    %v1871 = vld [vmem:[%s4 + $0x20] sm:$0xff]
    %v1872 = vld [vmem:[%s4 + $0x28] sm:$0xff]
    %v1873 = vld [vmem:[%s4 + $0x30] sm:$0xff]
    %v1874 = vld [vmem:[%s4 + $0x38] sm:$0xff]
    %v1875 = vld [vmem:[%s4 + $0x40] sm:$0xff]
    %v1876 = vld [vmem:[%s4 + $0x48] sm:$0xff]
    %v1877 = vld [vmem:[%s4 + $0x50] sm:$0xff]
    %v1878 = vld [vmem:[%s4 + $0x58] sm:$0xff]
    %v1879 = vld [vmem:[%s4 + $0x60] sm:$0xff]
    %v1880 = vld [vmem:[%s4 + $0x68] sm:$0xff]
    %v1881 = vld [vmem:[%s4 + $0x70] sm:$0xff]
    %v1882 = vld [vmem:[%s4 + $0x78] sm:$0xff]
    %v1883 = vld [vmem:[%s4 + $0x80] sm:$0xff]
    %v1884 = vld [vmem:[%s4 + $0x88] sm:$0xff]
    %v1885 = vld [vmem:[%s4 + $0x90] sm:$0xff]
    %v1886 = vld [vmem:[%s4 + $0x98] sm:$0xff]
    %v1887 = vld [vmem:[%s4 + $0xa0] sm:$0xff]
    %v1888 = vld [vmem:[%s4 + $0xa8] sm:$0xff]
    %v1889 = vld [vmem:[%s4 + $0xb0] sm:$0xff]
    %v1890 = vld [vmem:[%s4 + $0xb8] sm:$0xff]
    %v1891 = vld [vmem:[%s4 + $0xc0] sm:$0xff]
    %v1892 = vld [vmem:[%s4 + $0xc8] sm:$0xff]
    %v1893 = vld [vmem:[%s4 + $0xd0] sm:$0xff]
    %v1894 = vld [vmem:[%s4 + $0xd8] sm:$0xff]
    %v1895 = vld [vmem:[%s4 + $0xe0] sm:$0xff]
    %v1896 = vld [vmem:[%s4 + $0xe8] sm:$0xff]
    %v1897 = vld [vmem:[%s4 + $0xf0] sm:$0xff]
    %v1898 = vld [vmem:[%s4 + $0xf8] sm:$0xff]
    %1900 = vset.pattern.permute.xlu0 0
    %1901 = vperm.xlu0 %1900, %v1867
    %v1902 = vpop.permute.xlu0 %1901
    %1905 = vset.pattern.permute.xlu0 0
    %1906 = vperm.xlu0 %1905, %v1868
    %v1907 = vpop.permute.xlu0 %1906
    %1910 = vset.pattern.permute.xlu0 0
    %1911 = vperm.xlu0 %1910, %v1869
    %v1912 = vpop.permute.xlu0 %1911
    %1915 = vset.pattern.permute.xlu0 0
    %1916 = vperm.xlu0 %1915, %v1870
    %v1917 = vpop.permute.xlu0 %1916
    %1920 = vset.pattern.permute.xlu0 0
    %1921 = vperm.xlu0 %1920, %v1871
    %v1922 = vpop.permute.xlu0 %1921
    %1925 = vset.pattern.permute.xlu0 0
    %1926 = vperm.xlu0 %1925, %v1872
    %v1927 = vpop.permute.xlu0 %1926
    %1930 = vset.pattern.permute.xlu0 0
    %1931 = vperm.xlu0 %1930, %v1873
    %v1932 = vpop.permute.xlu0 %1931
    %1935 = vset.pattern.permute.xlu0 0
    %1936 = vperm.xlu0 %1935, %v1874
    %v1937 = vpop.permute.xlu0 %1936
    %1940 = vset.pattern.permute.xlu0 0
    %1941 = vperm.xlu0 %1940, %v1875
    %v1942 = vpop.permute.xlu0 %1941
    %1945 = vset.pattern.permute.xlu0 0
    %1946 = vperm.xlu0 %1945, %v1876
    %v1947 = vpop.permute.xlu0 %1946
    %1950 = vset.pattern.permute.xlu0 0
    %1951 = vperm.xlu0 %1950, %v1877
    %v1952 = vpop.permute.xlu0 %1951
    %1955 = vset.pattern.permute.xlu0 0
    %1956 = vperm.xlu0 %1955, %v1878
    %v1957 = vpop.permute.xlu0 %1956
    %1960 = vset.pattern.permute.xlu0 0
    %1961 = vperm.xlu0 %1960, %v1879
    %v1962 = vpop.permute.xlu0 %1961
    %1965 = vset.pattern.permute.xlu0 0
    %1966 = vperm.xlu0 %1965, %v1880
    %v1967 = vpop.permute.xlu0 %1966
    %1970 = vset.pattern.permute.xlu0 0
    %1971 = vperm.xlu0 %1970, %v1881
    %v1972 = vpop.permute.xlu0 %1971
    %1975 = vset.pattern.permute.xlu0 0
    %1976 = vperm.xlu0 %1975, %v1882
    %v1977 = vpop.permute.xlu0 %1976
    %1980 = vset.pattern.permute.xlu0 0
    %1981 = vperm.xlu0 %1980, %v1883
    %v1982 = vpop.permute.xlu0 %1981
    %1985 = vset.pattern.permute.xlu0 0
    %1986 = vperm.xlu0 %1985, %v1884
    %v1987 = vpop.permute.xlu0 %1986
    %1990 = vset.pattern.permute.xlu0 0
    %1991 = vperm.xlu0 %1990, %v1885
    %v1992 = vpop.permute.xlu0 %1991
    %1995 = vset.pattern.permute.xlu0 0
    %1996 = vperm.xlu0 %1995, %v1886
    %v1997 = vpop.permute.xlu0 %1996
    %2000 = vset.pattern.permute.xlu0 0
    %2001 = vperm.xlu0 %2000, %v1887
    %v2002 = vpop.permute.xlu0 %2001
    %2005 = vset.pattern.permute.xlu0 0
    %2006 = vperm.xlu0 %2005, %v1888
    %v2007 = vpop.permute.xlu0 %2006
    %2010 = vset.pattern.permute.xlu0 0
    %2011 = vperm.xlu0 %2010, %v1889
    %v2012 = vpop.permute.xlu0 %2011
    %2015 = vset.pattern.permute.xlu0 0
    %2016 = vperm.xlu0 %2015, %v1890
    %v2017 = vpop.permute.xlu0 %2016
    %2020 = vset.pattern.permute.xlu0 0
    %2021 = vperm.xlu0 %2020, %v1891
    %v2022 = vpop.permute.xlu0 %2021
    %2025 = vset.pattern.permute.xlu0 0
    %2026 = vperm.xlu0 %2025, %v1892
    %v2027 = vpop.permute.xlu0 %2026
    %2030 = vset.pattern.permute.xlu0 0
    %2031 = vperm.xlu0 %2030, %v1893
    %v2032 = vpop.permute.xlu0 %2031
    %2035 = vset.pattern.permute.xlu0 0
    %2036 = vperm.xlu0 %2035, %v1894
    %v2037 = vpop.permute.xlu0 %2036
    %2040 = vset.pattern.permute.xlu0 0
    %2041 = vperm.xlu0 %2040, %v1895
    %v2042 = vpop.permute.xlu0 %2041
    %2045 = vset.pattern.permute.xlu0 0
    %2046 = vperm.xlu0 %2045, %v1896
    %v2047 = vpop.permute.xlu0 %2046
    %2050 = vset.pattern.permute.xlu0 0
    %2051 = vperm.xlu0 %2050, %v1897
    %v2052 = vpop.permute.xlu0 %2051
    %2055 = vset.pattern.permute.xlu0 0
    %2056 = vperm.xlu0 %2055, %v1898
    %v2057 = vpop.permute.xlu0 %2056
    %v2123 = vunpack.c.l.b16 %v1771
    %v2124 = vunpack.c.h.b16 %v1771
    %v2125 = vunpack.c.l.b16 %v1772
    %v2126 = vunpack.c.h.b16 %v1772
    %v2127 = vunpack.c.l.b16 %v1773
    %v2128 = vunpack.c.h.b16 %v1773
    %v2129 = vunpack.c.l.b16 %v1774
    %v2130 = vunpack.c.h.b16 %v1774
    %v2131 = vunpack.c.l.b16 %v1775
    %v2132 = vunpack.c.h.b16 %v1775
    %v2133 = vunpack.c.l.b16 %v1776
    %v2134 = vunpack.c.h.b16 %v1776
    %v2135 = vunpack.c.l.b16 %v1777
    %v2136 = vunpack.c.h.b16 %v1777
    %v2137 = vunpack.c.l.b16 %v1778
    %v2138 = vunpack.c.h.b16 %v1778
    %v2139 = vunpack.c.l.b16 %v1779
    %v2140 = vunpack.c.h.b16 %v1779
    %v2141 = vunpack.c.l.b16 %v1780
    %v2142 = vunpack.c.h.b16 %v1780
    %v2143 = vunpack.c.l.b16 %v1781
    %v2144 = vunpack.c.h.b16 %v1781
    %v2145 = vunpack.c.l.b16 %v1782
    %v2146 = vunpack.c.h.b16 %v1782
    %v2147 = vunpack.c.l.b16 %v1783
    %v2148 = vunpack.c.h.b16 %v1783
    %v2149 = vunpack.c.l.b16 %v1784
    %v2150 = vunpack.c.h.b16 %v1784
    %v2151 = vunpack.c.l.b16 %v1785
    %v2152 = vunpack.c.h.b16 %v1785
    %v2153 = vunpack.c.l.b16 %v1786
    %v2154 = vunpack.c.h.b16 %v1786
    %v2155 = vunpack.c.l.b16 %v1787
    %v2156 = vunpack.c.h.b16 %v1787
    %v2157 = vunpack.c.l.b16 %v1788
    %v2158 = vunpack.c.h.b16 %v1788
    %v2159 = vunpack.c.l.b16 %v1789
    %v2160 = vunpack.c.h.b16 %v1789
    %v2161 = vunpack.c.l.b16 %v1790
    %v2162 = vunpack.c.h.b16 %v1790
    %v2163 = vunpack.c.l.b16 %v1791
    %v2164 = vunpack.c.h.b16 %v1791
    %v2165 = vunpack.c.l.b16 %v1792
    %v2166 = vunpack.c.h.b16 %v1792
    %v2167 = vunpack.c.l.b16 %v1793
    %v2168 = vunpack.c.h.b16 %v1793
    %v2169 = vunpack.c.l.b16 %v1794
    %v2170 = vunpack.c.h.b16 %v1794
    %v2171 = vunpack.c.l.b16 %v1795
    %v2172 = vunpack.c.h.b16 %v1795
    %v2173 = vunpack.c.l.b16 %v1796
    %v2174 = vunpack.c.h.b16 %v1796
    %v2175 = vunpack.c.l.b16 %v1797
    %v2176 = vunpack.c.h.b16 %v1797
    %v2177 = vunpack.c.l.b16 %v1798
    %v2178 = vunpack.c.h.b16 %v1798
    %v2179 = vunpack.c.l.b16 %v1799
    %v2180 = vunpack.c.h.b16 %v1799
    %v2181 = vunpack.c.l.b16 %v1800
    %v2182 = vunpack.c.h.b16 %v1800
    %v2183 = vunpack.c.l.b16 %v1801
    %v2184 = vunpack.c.h.b16 %v1801
    %v2185 = vunpack.c.l.b16 %v1802
    %v2186 = vunpack.c.h.b16 %v1802
    %v2187 = vunpack.c.l.b16 %v1803
    %v2188 = vunpack.c.h.b16 %v1803
    %v2189 = vunpack.c.l.b16 %v1804
    %v2190 = vunpack.c.h.b16 %v1804
    %v2191 = vunpack.c.l.b16 %v1805
    %v2192 = vunpack.c.h.b16 %v1805
    %v2193 = vunpack.c.l.b16 %v1806
    %v2194 = vunpack.c.h.b16 %v1806
    %v2195 = vunpack.c.l.b16 %v1807
    %v2196 = vunpack.c.h.b16 %v1807
    %v2197 = vunpack.c.l.b16 %v1808
    %v2198 = vunpack.c.h.b16 %v1808
    %v2199 = vunpack.c.l.b16 %v1809
    %v2200 = vunpack.c.h.b16 %v1809
    %v2201 = vunpack.c.l.b16 %v1810
    %v2202 = vunpack.c.h.b16 %v1810
    %v2203 = vunpack.c.l.b16 %v1811
    %v2204 = vunpack.c.h.b16 %v1811
    %v2205 = vunpack.c.l.b16 %v1812
    %v2206 = vunpack.c.h.b16 %v1812
    %v2207 = vunpack.c.l.b16 %v1813
    %v2208 = vunpack.c.h.b16 %v1813
    %v2209 = vunpack.c.l.b16 %v1814
    %v2210 = vunpack.c.h.b16 %v1814
    %v2211 = vunpack.c.l.b16 %v1815
    %v2212 = vunpack.c.h.b16 %v1815
    %v2213 = vunpack.c.l.b16 %v1816
    %v2214 = vunpack.c.h.b16 %v1816
    %v2215 = vunpack.c.l.b16 %v1817
    %v2216 = vunpack.c.h.b16 %v1817
    %v2217 = vunpack.c.l.b16 %v1818
    %v2218 = vunpack.c.h.b16 %v1818
    %v2219 = vunpack.c.l.b16 %v1819
    %v2220 = vunpack.c.h.b16 %v1819
    %v2221 = vunpack.c.l.b16 %v1820
    %v2222 = vunpack.c.h.b16 %v1820
    %v2223 = vunpack.c.l.b16 %v1821
    %v2224 = vunpack.c.h.b16 %v1821
    %v2225 = vunpack.c.l.b16 %v1822
    %v2226 = vunpack.c.h.b16 %v1822
    %v2227 = vunpack.c.l.b16 %v1823
    %v2228 = vunpack.c.h.b16 %v1823
    %v2229 = vunpack.c.l.b16 %v1824
    %v2230 = vunpack.c.h.b16 %v1824
    %v2231 = vunpack.c.l.b16 %v1825
    %v2232 = vunpack.c.h.b16 %v1825
    %v2233 = vunpack.c.l.b16 %v1826
    %v2234 = vunpack.c.h.b16 %v1826
    %v2235 = vunpack.c.l.b16 %v1827
    %v2236 = vunpack.c.h.b16 %v1827
    %v2237 = vunpack.c.l.b16 %v1828
    %v2238 = vunpack.c.h.b16 %v1828
    %v2239 = vunpack.c.l.b16 %v1829
    %v2240 = vunpack.c.h.b16 %v1829
    %v2241 = vunpack.c.l.b16 %v1830
    %v2242 = vunpack.c.h.b16 %v1830
    %v2243 = vunpack.c.l.b16 %v1831
    %v2244 = vunpack.c.h.b16 %v1831
    %v2245 = vunpack.c.l.b16 %v1832
    %v2246 = vunpack.c.h.b16 %v1832
    %v2247 = vunpack.c.l.b16 %v1833
    %v2248 = vunpack.c.h.b16 %v1833
    %v2249 = vunpack.c.l.b16 %v1834
    %v2250 = vunpack.c.h.b16 %v1834
    %v2251 = vpack.c.b16 %v2127, %v2123
    %v2252 = vpack.c.b16 %v2128, %v2124
    %v2253 = vpack.c.b16 %v2129, %v2125
    %v2254 = vpack.c.b16 %v2130, %v2126
    %v2255 = vpack.c.b16 %v2135, %v2131
    %v2256 = vpack.c.b16 %v2136, %v2132
    %v2257 = vpack.c.b16 %v2137, %v2133
    %v2258 = vpack.c.b16 %v2138, %v2134
    %v2259 = vpack.c.b16 %v2143, %v2139
    %v2260 = vpack.c.b16 %v2144, %v2140
    %v2261 = vpack.c.b16 %v2145, %v2141
    %v2262 = vpack.c.b16 %v2146, %v2142
    %v2263 = vpack.c.b16 %v2151, %v2147
    %v2264 = vpack.c.b16 %v2152, %v2148
    %v2265 = vpack.c.b16 %v2153, %v2149
    %v2266 = vpack.c.b16 %v2154, %v2150
    %v2267 = vpack.c.b16 %v2159, %v2155
    %v2268 = vpack.c.b16 %v2160, %v2156
    %v2269 = vpack.c.b16 %v2161, %v2157
    %v2270 = vpack.c.b16 %v2162, %v2158
    %v2271 = vpack.c.b16 %v2167, %v2163
    %v2272 = vpack.c.b16 %v2168, %v2164
    %v2273 = vpack.c.b16 %v2169, %v2165
    %v2274 = vpack.c.b16 %v2170, %v2166
    %v2275 = vpack.c.b16 %v2175, %v2171
    %v2276 = vpack.c.b16 %v2176, %v2172
    %v2277 = vpack.c.b16 %v2177, %v2173
    %v2278 = vpack.c.b16 %v2178, %v2174
    %v2279 = vpack.c.b16 %v2183, %v2179
    %v2280 = vpack.c.b16 %v2184, %v2180
    %v2281 = vpack.c.b16 %v2185, %v2181
    %v2282 = vpack.c.b16 %v2186, %v2182
    %v2283 = vpack.c.b16 %v2191, %v2187
    %v2284 = vpack.c.b16 %v2192, %v2188
    %v2285 = vpack.c.b16 %v2193, %v2189
    %v2286 = vpack.c.b16 %v2194, %v2190
    %v2287 = vpack.c.b16 %v2199, %v2195
    %v2288 = vpack.c.b16 %v2200, %v2196
    %v2289 = vpack.c.b16 %v2201, %v2197
    %v2290 = vpack.c.b16 %v2202, %v2198
    %v2291 = vpack.c.b16 %v2207, %v2203
    %v2292 = vpack.c.b16 %v2208, %v2204
    %v2293 = vpack.c.b16 %v2209, %v2205
    %v2294 = vpack.c.b16 %v2210, %v2206
    %v2295 = vpack.c.b16 %v2215, %v2211
    %v2296 = vpack.c.b16 %v2216, %v2212
    %v2297 = vpack.c.b16 %v2217, %v2213
    %v2298 = vpack.c.b16 %v2218, %v2214
    %v2299 = vpack.c.b16 %v2223, %v2219
    %v2300 = vpack.c.b16 %v2224, %v2220
    %v2301 = vpack.c.b16 %v2225, %v2221
    %v2302 = vpack.c.b16 %v2226, %v2222
    %v2303 = vpack.c.b16 %v2231, %v2227
    %v2304 = vpack.c.b16 %v2232, %v2228
    %v2305 = vpack.c.b16 %v2233, %v2229
    %v2306 = vpack.c.b16 %v2234, %v2230
    %v2307 = vpack.c.b16 %v2239, %v2235
    %v2308 = vpack.c.b16 %v2240, %v2236
    %v2309 = vpack.c.b16 %v2241, %v2237
    %v2310 = vpack.c.b16 %v2242, %v2238
    %v2311 = vpack.c.b16 %v2247, %v2243
    %v2312 = vpack.c.b16 %v2248, %v2244
    %v2313 = vpack.c.b16 %v2249, %v2245
    %v2314 = vpack.c.b16 %v2250, %v2246
    %2379 = vmatprep.subr.bf16.mxu0 0
    %2380 = vmatpush1.bf16.msra.mxu0 %v1835
    %2381 = vmatprep.subr.bf16.mxu0 0
    %2382 = vmatpush1.bf16.msra.mxu0 %v1836
    %2383 = vmatprep.subr.bf16.mxu0 0
    %2384 = vmatpush1.bf16.msra.mxu0 %v1837
    %2385 = vmatprep.subr.bf16.mxu0 0
    %2386 = vmatpush1.bf16.msra.mxu0 %v1838
    %2387 = vmatprep.subr.bf16.mxu0 0
    %2388 = vmatpush1.bf16.msra.mxu0 %v1839
    %2389 = vmatprep.subr.bf16.mxu0 0
    %2390 = vmatpush1.bf16.msra.mxu0 %v1840
    %2391 = vmatprep.subr.bf16.mxu0 0
    %2392 = vmatpush1.bf16.msra.mxu0 %v1841
    %2393 = vmatprep.subr.bf16.mxu0 0
    %2394 = vmatpush1.bf16.msra.mxu0 %v1842
    %2395 = vmatprep.subr.bf16.mxu0 0
    %2396 = vmatpush1.bf16.msra.mxu0 %v1843
    %2397 = vmatprep.subr.bf16.mxu0 0
    %2398 = vmatpush1.bf16.msra.mxu0 %v1844
    %2399 = vmatprep.subr.bf16.mxu0 0
    %2400 = vmatpush1.bf16.msra.mxu0 %v1845
    %2401 = vmatprep.subr.bf16.mxu0 0
    %2402 = vmatpush1.bf16.msra.mxu0 %v1846
    %2403 = vmatprep.subr.bf16.mxu0 0
    %2404 = vmatpush1.bf16.msra.mxu0 %v1847
    %2405 = vmatprep.subr.bf16.mxu0 0
    %2406 = vmatpush1.bf16.msra.mxu0 %v1848
    %2407 = vmatprep.subr.bf16.mxu0 0
    %2408 = vmatpush1.bf16.msra.mxu0 %v1849
    %2409 = vmatprep.subr.bf16.mxu0 0
    %2410 = vmatpush1.bf16.msra.mxu0 %v1850
    %2411 = vmatprep.mubr.bf16.mxu0 %v2252
    %2412 = vmatmul.mubr.bf16.gmra.mrb[0].mxu0 %v2251
    %v2413 = vpop.f32.mrb[0].mxu0
    %v2414 = vadd.f32 %v1902, %v2413
    %v2415 = vpop.f32.mrb[0].mxu0
    %v2416 = vpop.f32.mrb[0].mxu0
    %v2417 = vadd.f32 %v1907, %v2416
    %v2418 = vpop.f32.mrb[0].mxu0
    %2419 = vmatprep.mubr.bf16.mxu0 %v2256
    %2420 = vmatmul.mubr.bf16.gmra.mrb[0].mxu0 %v2255
    %v2421 = vpop.f32.mrb[0].mxu0
    %v2422 = vadd.f32 %v1912, %v2421
    %v2423 = vpop.f32.mrb[0].mxu0
    %v2424 = vpop.f32.mrb[0].mxu0
    %v2425 = vadd.f32 %v1917, %v2424
    %v2426 = vpop.f32.mrb[0].mxu0
    %2427 = vmatprep.mubr.bf16.mxu0 %v2260
    %2428 = vmatmul.mubr.bf16.gmra.mrb[0].mxu0 %v2259
    %v2429 = vpop.f32.mrb[0].mxu0
    %v2430 = vadd.f32 %v1922, %v2429
    %v2431 = vpop.f32.mrb[0].mxu0
    %v2432 = vpop.f32.mrb[0].mxu0
    %v2433 = vadd.f32 %v1927, %v2432
    %v2434 = vpop.f32.mrb[0].mxu0
    %2435 = vmatprep.mubr.bf16.mxu0 %v2264
    %2436 = vmatmul.mubr.bf16.gmra.mrb[0].mxu0 %v2263
    %v2437 = vpop.f32.mrb[0].mxu0
    %v2438 = vadd.f32 %v1932, %v2437
    %v2439 = vpop.f32.mrb[0].mxu0
    %v2440 = vpop.f32.mrb[0].mxu0
    %v2441 = vadd.f32 %v1937, %v2440
    %v2442 = vpop.f32.mrb[0].mxu0
    %2443 = vmatprep.mubr.bf16.mxu0 %v2268
    %2444 = vmatmul.mubr.bf16.gmra.mrb[0].mxu0 %v2267
    %v2445 = vpop.f32.mrb[0].mxu0
    %v2446 = vadd.f32 %v1942, %v2445
    %v2447 = vpop.f32.mrb[0].mxu0
    %v2448 = vpop.f32.mrb[0].mxu0
    %v2449 = vadd.f32 %v1947, %v2448
    %v2450 = vpop.f32.mrb[0].mxu0
    %2451 = vmatprep.mubr.bf16.mxu0 %v2272
    %2452 = vmatmul.mubr.bf16.gmra.mrb[0].mxu0 %v2271
    %v2453 = vpop.f32.mrb[0].mxu0
    %v2454 = vadd.f32 %v1952, %v2453
    %v2455 = vpop.f32.mrb[0].mxu0
    %v2456 = vpop.f32.mrb[0].mxu0
    %v2457 = vadd.f32 %v1957, %v2456
    %v2458 = vpop.f32.mrb[0].mxu0
    %2459 = vmatprep.mubr.bf16.mxu0 %v2276
    %2460 = vmatmul.mubr.bf16.gmra.mrb[0].mxu0 %v2275
    %v2461 = vpop.f32.mrb[0].mxu0
    %v2462 = vadd.f32 %v1962, %v2461
    %v2463 = vpop.f32.mrb[0].mxu0
    %v2464 = vpop.f32.mrb[0].mxu0
    %v2465 = vadd.f32 %v1967, %v2464
    %v2466 = vpop.f32.mrb[0].mxu0
    %2467 = vmatprep.mubr.bf16.mxu0 %v2280
    %2468 = vmatmul.mubr.bf16.gmra.mrb[0].mxu0 %v2279
    %v2469 = vpop.f32.mrb[0].mxu0
    %v2470 = vadd.f32 %v1972, %v2469
    %v2471 = vpop.f32.mrb[0].mxu0
    %v2472 = vpop.f32.mrb[0].mxu0
    %v2473 = vadd.f32 %v1977, %v2472
    %v2474 = vpop.f32.mrb[0].mxu0
    %2475 = vmatprep.mubr.bf16.mxu0 %v2284
    %2476 = vmatmul.mubr.bf16.gmra.mrb[0].mxu0 %v2283
    %v2477 = vpop.f32.mrb[0].mxu0
    %v2478 = vadd.f32 %v1982, %v2477
    %v2479 = vpop.f32.mrb[0].mxu0
    %v2480 = vpop.f32.mrb[0].mxu0
    %v2481 = vadd.f32 %v1987, %v2480
    %v2482 = vpop.f32.mrb[0].mxu0
    %2483 = vmatprep.mubr.bf16.mxu0 %v2288
    %2484 = vmatmul.mubr.bf16.gmra.mrb[0].mxu0 %v2287
    %v2485 = vpop.f32.mrb[0].mxu0
    %v2486 = vadd.f32 %v1992, %v2485
    %v2487 = vpop.f32.mrb[0].mxu0
    %v2488 = vpop.f32.mrb[0].mxu0
    %v2489 = vadd.f32 %v1997, %v2488
    %v2490 = vpop.f32.mrb[0].mxu0
    %2491 = vmatprep.mubr.bf16.mxu0 %v2292
    %2492 = vmatmul.mubr.bf16.gmra.mrb[0].mxu0 %v2291
    %v2493 = vpop.f32.mrb[0].mxu0
    %v2494 = vadd.f32 %v2002, %v2493
    %v2495 = vpop.f32.mrb[0].mxu0
    %v2496 = vpop.f32.mrb[0].mxu0
    %v2497 = vadd.f32 %v2007, %v2496
    %v2498 = vpop.f32.mrb[0].mxu0
    %2499 = vmatprep.mubr.bf16.mxu0 %v2296
    %2500 = vmatmul.mubr.bf16.gmra.mrb[0].mxu0 %v2295
    %v2501 = vpop.f32.mrb[0].mxu0
    %v2502 = vadd.f32 %v2012, %v2501
    %v2503 = vpop.f32.mrb[0].mxu0
    %v2504 = vpop.f32.mrb[0].mxu0
    %v2505 = vadd.f32 %v2017, %v2504
    %v2506 = vpop.f32.mrb[0].mxu0
    %2507 = vmatprep.mubr.bf16.mxu0 %v2300
    %2508 = vmatmul.mubr.bf16.gmra.mrb[0].mxu0 %v2299
    %v2509 = vpop.f32.mrb[0].mxu0
    %v2510 = vadd.f32 %v2022, %v2509
    %v2511 = vpop.f32.mrb[0].mxu0
    %v2512 = vpop.f32.mrb[0].mxu0
    %v2513 = vadd.f32 %v2027, %v2512
    %v2514 = vpop.f32.mrb[0].mxu0
    %2515 = vmatprep.mubr.bf16.mxu0 %v2304
    %2516 = vmatmul.mubr.bf16.gmra.mrb[0].mxu0 %v2303
    %v2517 = vpop.f32.mrb[0].mxu0
    %v2518 = vadd.f32 %v2032, %v2517
    %v2519 = vpop.f32.mrb[0].mxu0
    %v2520 = vpop.f32.mrb[0].mxu0
    %v2521 = vadd.f32 %v2037, %v2520
    %v2522 = vpop.f32.mrb[0].mxu0
    %2523 = vmatprep.mubr.bf16.mxu0 %v2308
    %2524 = vmatmul.mubr.bf16.gmra.mrb[0].mxu0 %v2307
    %v2525 = vpop.f32.mrb[0].mxu0
    %v2526 = vadd.f32 %v2042, %v2525
    %v2527 = vpop.f32.mrb[0].mxu0
    %v2528 = vpop.f32.mrb[0].mxu0
    %v2529 = vadd.f32 %v2047, %v2528
    %v2530 = vpop.f32.mrb[0].mxu0
    %2531 = vmatprep.mubr.bf16.mxu0 %v2312
    %2532 = vmatmul.mubr.bf16.gmra.mrb[0].mxu0 %v2311
    %v2533 = vpop.f32.mrb[0].mxu0
    %v2534 = vadd.f32 %v2052, %v2533
    %v2535 = vpop.f32.mrb[0].mxu0
    %v2536 = vpop.f32.mrb[0].mxu0
    %v2537 = vadd.f32 %v2057, %v2536
    %v2538 = vpop.f32.mrb[0].mxu0
    %2539 = vdwg.mxu0
    %2540 = vmatprep.subr.bf16.mxu0 0
    %2541 = vmatpush1.bf16.msra.mxu0 %v1851
    %2542 = vmatprep.subr.bf16.mxu0 0
    %2543 = vmatpush1.bf16.msra.mxu0 %v1852
    %2544 = vmatprep.subr.bf16.mxu0 0
    %2545 = vmatpush1.bf16.msra.mxu0 %v1853
    %2546 = vmatprep.subr.bf16.mxu0 0
    %2547 = vmatpush1.bf16.msra.mxu0 %v1854
    %2548 = vmatprep.subr.bf16.mxu0 0
    %2549 = vmatpush1.bf16.msra.mxu0 %v1855
    %2550 = vmatprep.subr.bf16.mxu0 0
    %2551 = vmatpush1.bf16.msra.mxu0 %v1856
    %2552 = vmatprep.subr.bf16.mxu0 0
    %2553 = vmatpush1.bf16.msra.mxu0 %v1857
    %2554 = vmatprep.subr.bf16.mxu0 0
    %2555 = vmatpush1.bf16.msra.mxu0 %v1858
    %2556 = vmatprep.subr.bf16.mxu0 0
    %2557 = vmatpush1.bf16.msra.mxu0 %v1859
    %2558 = vmatprep.subr.bf16.mxu0 0
    %2559 = vmatpush1.bf16.msra.mxu0 %v1860
    %2560 = vmatprep.subr.bf16.mxu0 0
    %2561 = vmatpush1.bf16.msra.mxu0 %v1861
    %2562 = vmatprep.subr.bf16.mxu0 0
    %2563 = vmatpush1.bf16.msra.mxu0 %v1862
    %2564 = vmatprep.subr.bf16.mxu0 0
    %2565 = vmatpush1.bf16.msra.mxu0 %v1863
    %2566 = vmatprep.subr.bf16.mxu0 0
    %2567 = vmatpush1.bf16.msra.mxu0 %v1864
    %2568 = vmatprep.subr.bf16.mxu0 0
    %2569 = vmatpush1.bf16.msra.mxu0 %v1865
    %2570 = vmatprep.subr.bf16.mxu0 0
    %2571 = vmatpush1.bf16.msra.mxu0 %v1866
    %2572 = vmatprep.mubr.bf16.mxu0 %v2254
    %2573 = vmatmul.mubr.bf16.gmra.mrb[0].mxu0 %v2253
    %v2574 = vpop.f32.mrb[0].mxu0
    %v2575 = vadd.f32 %v2414, %v2574
    %v2576 = vpop.f32.mrb[0].mxu0
    %v2577 = vpop.f32.mrb[0].mxu0
    %v2578 = vadd.f32 %v2417, %v2577
    %v2579 = vpop.f32.mrb[0].mxu0
    %2580 = vmatprep.mubr.bf16.mxu0 %v2258
    %2581 = vmatmul.mubr.bf16.gmra.mrb[0].mxu0 %v2257
    %v2582 = vpop.f32.mrb[0].mxu0
    %v2583 = vadd.f32 %v2422, %v2582
    %v2584 = vpop.f32.mrb[0].mxu0
    %v2585 = vpop.f32.mrb[0].mxu0
    %v2586 = vadd.f32 %v2425, %v2585
    %v2587 = vpop.f32.mrb[0].mxu0
    %2588 = vmatprep.mubr.bf16.mxu0 %v2262
    %2589 = vmatmul.mubr.bf16.gmra.mrb[0].mxu0 %v2261
    %v2590 = vpop.f32.mrb[0].mxu0
    %v2591 = vadd.f32 %v2430, %v2590
    %v2592 = vpop.f32.mrb[0].mxu0
    %v2593 = vpop.f32.mrb[0].mxu0
    %v2594 = vadd.f32 %v2433, %v2593
    %v2595 = vpop.f32.mrb[0].mxu0
    %2596 = vmatprep.mubr.bf16.mxu0 %v2266
    %2597 = vmatmul.mubr.bf16.gmra.mrb[0].mxu0 %v2265
    %v2598 = vpop.f32.mrb[0].mxu0
    %v2599 = vadd.f32 %v2438, %v2598
    %v2600 = vpop.f32.mrb[0].mxu0
    %v2601 = vpop.f32.mrb[0].mxu0
    %v2602 = vadd.f32 %v2441, %v2601
    %v2603 = vpop.f32.mrb[0].mxu0
    %2604 = vmatprep.mubr.bf16.mxu0 %v2270
    %2605 = vmatmul.mubr.bf16.gmra.mrb[0].mxu0 %v2269
    %v2606 = vpop.f32.mrb[0].mxu0
    %v2607 = vadd.f32 %v2446, %v2606
    %v2608 = vpop.f32.mrb[0].mxu0
    %v2609 = vpop.f32.mrb[0].mxu0
    %v2610 = vadd.f32 %v2449, %v2609
    %v2611 = vpop.f32.mrb[0].mxu0
    %2612 = vmatprep.mubr.bf16.mxu0 %v2274
    %2613 = vmatmul.mubr.bf16.gmra.mrb[0].mxu0 %v2273
    %v2614 = vpop.f32.mrb[0].mxu0
    %v2615 = vadd.f32 %v2454, %v2614
    %v2616 = vpop.f32.mrb[0].mxu0
    %v2617 = vpop.f32.mrb[0].mxu0
    %v2618 = vadd.f32 %v2457, %v2617
    %v2619 = vpop.f32.mrb[0].mxu0
    %2620 = vmatprep.mubr.bf16.mxu0 %v2278
    %2621 = vmatmul.mubr.bf16.gmra.mrb[0].mxu0 %v2277
    %v2622 = vpop.f32.mrb[0].mxu0
    %v2623 = vadd.f32 %v2462, %v2622
    %v2624 = vpop.f32.mrb[0].mxu0
    %v2625 = vpop.f32.mrb[0].mxu0
    %v2626 = vadd.f32 %v2465, %v2625
    %v2627 = vpop.f32.mrb[0].mxu0
    %2628 = vmatprep.mubr.bf16.mxu0 %v2282
    %2629 = vmatmul.mubr.bf16.gmra.mrb[0].mxu0 %v2281
    %v2630 = vpop.f32.mrb[0].mxu0
    %v2631 = vadd.f32 %v2470, %v2630
    %v2632 = vpop.f32.mrb[0].mxu0
    %v2633 = vpop.f32.mrb[0].mxu0
    %v2634 = vadd.f32 %v2473, %v2633
    %v2635 = vpop.f32.mrb[0].mxu0
    %2636 = vmatprep.mubr.bf16.mxu0 %v2286
    %2637 = vmatmul.mubr.bf16.gmra.mrb[0].mxu0 %v2285
    %v2638 = vpop.f32.mrb[0].mxu0
    %v2639 = vadd.f32 %v2478, %v2638
    %v2640 = vpop.f32.mrb[0].mxu0
    %v2641 = vpop.f32.mrb[0].mxu0
    %v2642 = vadd.f32 %v2481, %v2641
    %v2643 = vpop.f32.mrb[0].mxu0
    %2644 = vmatprep.mubr.bf16.mxu0 %v2290
    %2645 = vmatmul.mubr.bf16.gmra.mrb[0].mxu0 %v2289
    %v2646 = vpop.f32.mrb[0].mxu0
    %v2647 = vadd.f32 %v2486, %v2646
    %v2648 = vpop.f32.mrb[0].mxu0
    %v2649 = vpop.f32.mrb[0].mxu0
    %v2650 = vadd.f32 %v2489, %v2649
    %v2651 = vpop.f32.mrb[0].mxu0
    %2652 = vmatprep.mubr.bf16.mxu0 %v2294
    %2653 = vmatmul.mubr.bf16.gmra.mrb[0].mxu0 %v2293
    %v2654 = vpop.f32.mrb[0].mxu0
    %v2655 = vadd.f32 %v2494, %v2654
    %v2656 = vpop.f32.mrb[0].mxu0
    %v2657 = vpop.f32.mrb[0].mxu0
    %v2658 = vadd.f32 %v2497, %v2657
    %v2659 = vpop.f32.mrb[0].mxu0
    %2660 = vmatprep.mubr.bf16.mxu0 %v2298
    %2661 = vmatmul.mubr.bf16.gmra.mrb[0].mxu0 %v2297
    %v2662 = vpop.f32.mrb[0].mxu0
    %v2663 = vadd.f32 %v2502, %v2662
    %v2664 = vpop.f32.mrb[0].mxu0
    %v2665 = vpop.f32.mrb[0].mxu0
    %v2666 = vadd.f32 %v2505, %v2665
    %v2667 = vpop.f32.mrb[0].mxu0
    %2668 = vmatprep.mubr.bf16.mxu0 %v2302
    %2669 = vmatmul.mubr.bf16.gmra.mrb[0].mxu0 %v2301
    %v2670 = vpop.f32.mrb[0].mxu0
    %v2671 = vadd.f32 %v2510, %v2670
    %v2672 = vpop.f32.mrb[0].mxu0
    %v2673 = vpop.f32.mrb[0].mxu0
    %v2674 = vadd.f32 %v2513, %v2673
    %v2675 = vpop.f32.mrb[0].mxu0
    %2676 = vmatprep.mubr.bf16.mxu0 %v2306
    %2677 = vmatmul.mubr.bf16.gmra.mrb[0].mxu0 %v2305
    %v2678 = vpop.f32.mrb[0].mxu0
    %v2679 = vadd.f32 %v2518, %v2678
    %v2680 = vpop.f32.mrb[0].mxu0
    %v2681 = vpop.f32.mrb[0].mxu0
    %v2682 = vadd.f32 %v2521, %v2681
    %v2683 = vpop.f32.mrb[0].mxu0
    %2684 = vmatprep.mubr.bf16.mxu0 %v2310
    %2685 = vmatmul.mubr.bf16.gmra.mrb[0].mxu0 %v2309
    %v2686 = vpop.f32.mrb[0].mxu0
    %v2687 = vadd.f32 %v2526, %v2686
    %v2688 = vpop.f32.mrb[0].mxu0
    %v2689 = vpop.f32.mrb[0].mxu0
    %v2690 = vadd.f32 %v2529, %v2689
    %v2691 = vpop.f32.mrb[0].mxu0
    %2692 = vmatprep.mubr.bf16.mxu0 %v2314
    %2693 = vmatmul.mubr.bf16.gmra.mrb[0].mxu0 %v2313
    %v2694 = vpop.f32.mrb[0].mxu0
    %v2695 = vadd.f32 %v2534, %v2694
    %v2696 = vpop.f32.mrb[0].mxu0
    %v2697 = vpop.f32.mrb[0].mxu0
    %v2698 = vadd.f32 %v2537, %v2697
    %v2699 = vpop.f32.mrb[0].mxu0
    %2700 = vdwg.mxu0
    %v2701 = vmax.f32 %v2575, 0.0
    %v2702 = vmax.f32 %v2578, 0.0
    %v2703 = vmax.f32 %v2583, 0.0
    %v2704 = vmax.f32 %v2586, 0.0
    %v2705 = vmax.f32 %v2591, 0.0
    %v2706 = vmax.f32 %v2594, 0.0
    %v2707 = vmax.f32 %v2599, 0.0
    %v2708 = vmax.f32 %v2602, 0.0
    %v2709 = vmax.f32 %v2607, 0.0
    %v2710 = vmax.f32 %v2610, 0.0
    %v2711 = vmax.f32 %v2615, 0.0
    %v2712 = vmax.f32 %v2618, 0.0
    %v2713 = vmax.f32 %v2623, 0.0
    %v2714 = vmax.f32 %v2626, 0.0
    %v2715 = vmax.f32 %v2631, 0.0
    %v2716 = vmax.f32 %v2634, 0.0
    %v2717 = vmax.f32 %v2639, 0.0
    %v2718 = vmax.f32 %v2642, 0.0
    %v2719 = vmax.f32 %v2647, 0.0
    %v2720 = vmax.f32 %v2650, 0.0
    %v2721 = vmax.f32 %v2655, 0.0
    %v2722 = vmax.f32 %v2658, 0.0
    %v2723 = vmax.f32 %v2663, 0.0
    %v2724 = vmax.f32 %v2666, 0.0
    %v2725 = vmax.f32 %v2671, 0.0
    %v2726 = vmax.f32 %v2674, 0.0
    %v2727 = vmax.f32 %v2679, 0.0
    %v2728 = vmax.f32 %v2682, 0.0
    %v2729 = vmax.f32 %v2687, 0.0
    %v2730 = vmax.f32 %v2690, 0.0
    %v2731 = vmax.f32 %v2695, 0.0
    %v2732 = vmax.f32 %v2698, 0.0
    %v2733 = vld [vmem:[%s5] sm:$0xff]
    %v2734 = vld [vmem:[%s5 + $0x8] sm:$0xff]
    %v2735 = vld [vmem:[%s5 + $0x10] sm:$0xff]
    %v2736 = vld [vmem:[%s5 + $0x18] sm:$0xff]
    %v2737 = vld [vmem:[%s5 + $0x20] sm:$0xff]
    %v2738 = vld [vmem:[%s5 + $0x28] sm:$0xff]
    %v2739 = vld [vmem:[%s5 + $0x30] sm:$0xff]
    %v2740 = vld [vmem:[%s5 + $0x38] sm:$0xff]
    %v2741 = vld [vmem:[%s5 + $0x40] sm:$0xff]
    %v2742 = vld [vmem:[%s5 + $0x48] sm:$0xff]
    %v2743 = vld [vmem:[%s5 + $0x50] sm:$0xff]
    %v2744 = vld [vmem:[%s5 + $0x58] sm:$0xff]
    %v2745 = vld [vmem:[%s5 + $0x60] sm:$0xff]
    %v2746 = vld [vmem:[%s5 + $0x68] sm:$0xff]
    %v2747 = vld [vmem:[%s5 + $0x70] sm:$0xff]
    %v2748 = vld [vmem:[%s5 + $0x78] sm:$0xff]
    %v2749 = vld [vmem:[%s5 + $0x80] sm:$0xff]
    %v2750 = vld [vmem:[%s5 + $0x88] sm:$0xff]
    %v2751 = vld [vmem:[%s5 + $0x90] sm:$0xff]
    %v2752 = vld [vmem:[%s5 + $0x98] sm:$0xff]
    %v2753 = vld [vmem:[%s5 + $0xa0] sm:$0xff]
    %v2754 = vld [vmem:[%s5 + $0xa8] sm:$0xff]
    %v2755 = vld [vmem:[%s5 + $0xb0] sm:$0xff]
    %v2756 = vld [vmem:[%s5 + $0xb8] sm:$0xff]
    %v2757 = vld [vmem:[%s5 + $0xc0] sm:$0xff]
    %v2758 = vld [vmem:[%s5 + $0xc8] sm:$0xff]
    %v2759 = vld [vmem:[%s5 + $0xd0] sm:$0xff]
    %v2760 = vld [vmem:[%s5 + $0xd8] sm:$0xff]
    %v2761 = vld [vmem:[%s5 + $0xe0] sm:$0xff]
    %v2762 = vld [vmem:[%s5 + $0xe8] sm:$0xff]
    %v2763 = vld [vmem:[%s5 + $0xf0] sm:$0xff]
    %v2764 = vld [vmem:[%s5 + $0xf8] sm:$0xff]
    %2766 = vset.pattern.permute.xlu0 0
    %2767 = vperm.xlu0 %2766, %v2733
    %v2768 = vpop.permute.xlu0 %2767
    %2771 = vset.pattern.permute.xlu0 0
    %2772 = vperm.xlu0 %2771, %v2734
    %v2773 = vpop.permute.xlu0 %2772
    %2776 = vset.pattern.permute.xlu0 0
    %2777 = vperm.xlu0 %2776, %v2735
    %v2778 = vpop.permute.xlu0 %2777
    %2781 = vset.pattern.permute.xlu0 0
    %2782 = vperm.xlu0 %2781, %v2736
    %v2783 = vpop.permute.xlu0 %2782
    %2786 = vset.pattern.permute.xlu0 0
    %2787 = vperm.xlu0 %2786, %v2737
    %v2788 = vpop.permute.xlu0 %2787
    %2791 = vset.pattern.permute.xlu0 0
    %2792 = vperm.xlu0 %2791, %v2738
    %v2793 = vpop.permute.xlu0 %2792
    %2796 = vset.pattern.permute.xlu0 0
    %2797 = vperm.xlu0 %2796, %v2739
    %v2798 = vpop.permute.xlu0 %2797
    %2801 = vset.pattern.permute.xlu0 0
    %2802 = vperm.xlu0 %2801, %v2740
    %v2803 = vpop.permute.xlu0 %2802
    %2806 = vset.pattern.permute.xlu0 0
    %2807 = vperm.xlu0 %2806, %v2741
    %v2808 = vpop.permute.xlu0 %2807
    %2811 = vset.pattern.permute.xlu0 0
    %2812 = vperm.xlu0 %2811, %v2742
    %v2813 = vpop.permute.xlu0 %2812
    %2816 = vset.pattern.permute.xlu0 0
    %2817 = vperm.xlu0 %2816, %v2743
    %v2818 = vpop.permute.xlu0 %2817
    %2821 = vset.pattern.permute.xlu0 0
    %2822 = vperm.xlu0 %2821, %v2744
    %v2823 = vpop.permute.xlu0 %2822
    %2826 = vset.pattern.permute.xlu0 0
    %2827 = vperm.xlu0 %2826, %v2745
    %v2828 = vpop.permute.xlu0 %2827
    %2831 = vset.pattern.permute.xlu0 0
    %2832 = vperm.xlu0 %2831, %v2746
    %v2833 = vpop.permute.xlu0 %2832
    %2836 = vset.pattern.permute.xlu0 0
    %2837 = vperm.xlu0 %2836, %v2747
    %v2838 = vpop.permute.xlu0 %2837
    %2841 = vset.pattern.permute.xlu0 0
    %2842 = vperm.xlu0 %2841, %v2748
    %v2843 = vpop.permute.xlu0 %2842
    %2846 = vset.pattern.permute.xlu0 0
    %2847 = vperm.xlu0 %2846, %v2749
    %v2848 = vpop.permute.xlu0 %2847
    %2851 = vset.pattern.permute.xlu0 0
    %2852 = vperm.xlu0 %2851, %v2750
    %v2853 = vpop.permute.xlu0 %2852
    %2856 = vset.pattern.permute.xlu0 0
    %2857 = vperm.xlu0 %2856, %v2751
    %v2858 = vpop.permute.xlu0 %2857
    %2861 = vset.pattern.permute.xlu0 0
    %2862 = vperm.xlu0 %2861, %v2752
    %v2863 = vpop.permute.xlu0 %2862
    %2866 = vset.pattern.permute.xlu0 0
    %2867 = vperm.xlu0 %2866, %v2753
    %v2868 = vpop.permute.xlu0 %2867
    %2871 = vset.pattern.permute.xlu0 0
    %2872 = vperm.xlu0 %2871, %v2754
    %v2873 = vpop.permute.xlu0 %2872
    %2876 = vset.pattern.permute.xlu0 0
    %2877 = vperm.xlu0 %2876, %v2755
    %v2878 = vpop.permute.xlu0 %2877
    %2881 = vset.pattern.permute.xlu0 0
    %2882 = vperm.xlu0 %2881, %v2756
    %v2883 = vpop.permute.xlu0 %2882
    %2886 = vset.pattern.permute.xlu0 0
    %2887 = vperm.xlu0 %2886, %v2757
    %v2888 = vpop.permute.xlu0 %2887
    %2891 = vset.pattern.permute.xlu0 0
    %2892 = vperm.xlu0 %2891, %v2758
    %v2893 = vpop.permute.xlu0 %2892
    %2896 = vset.pattern.permute.xlu0 0
    %2897 = vperm.xlu0 %2896, %v2759
    %v2898 = vpop.permute.xlu0 %2897
    %2901 = vset.pattern.permute.xlu0 0
    %2902 = vperm.xlu0 %2901, %v2760
    %v2903 = vpop.permute.xlu0 %2902
    %2906 = vset.pattern.permute.xlu0 0
    %2907 = vperm.xlu0 %2906, %v2761
    %v2908 = vpop.permute.xlu0 %2907
    %2911 = vset.pattern.permute.xlu0 0
    %2912 = vperm.xlu0 %2911, %v2762
    %v2913 = vpop.permute.xlu0 %2912
    %2916 = vset.pattern.permute.xlu0 0
    %2917 = vperm.xlu0 %2916, %v2763
    %v2918 = vpop.permute.xlu0 %2917
    %2921 = vset.pattern.permute.xlu0 0
    %2922 = vperm.xlu0 %2921, %v2764
    %v2923 = vpop.permute.xlu0 %2922
    %v2925 = vmul.f32 %v2701, %v2768
    %v2926 = vmul.f32 %v2702, %v2773
    %v2927 = vmul.f32 %v2703, %v2778
    %v2928 = vmul.f32 %v2704, %v2783
    %v2929 = vmul.f32 %v2705, %v2788
    %v2930 = vmul.f32 %v2706, %v2793
    %v2931 = vmul.f32 %v2707, %v2798
    %v2932 = vmul.f32 %v2708, %v2803
    %v2933 = vmul.f32 %v2709, %v2808
    %v2934 = vmul.f32 %v2710, %v2813
    %v2935 = vmul.f32 %v2711, %v2818
    %v2936 = vmul.f32 %v2712, %v2823
    %v2937 = vmul.f32 %v2713, %v2828
    %v2938 = vmul.f32 %v2714, %v2833
    %v2939 = vmul.f32 %v2715, %v2838
    %v2940 = vmul.f32 %v2716, %v2843
    %v2941 = vmul.f32 %v2717, %v2848
    %v2942 = vmul.f32 %v2718, %v2853
    %v2943 = vmul.f32 %v2719, %v2858
    %v2944 = vmul.f32 %v2720, %v2863
    %v2945 = vmul.f32 %v2721, %v2868
    %v2946 = vmul.f32 %v2722, %v2873
    %v2947 = vmul.f32 %v2723, %v2878
    %v2948 = vmul.f32 %v2724, %v2883
    %v2949 = vmul.f32 %v2725, %v2888
    %v2950 = vmul.f32 %v2726, %v2893
    %v2951 = vmul.f32 %v2727, %v2898
    %v2952 = vmul.f32 %v2728, %v2903
    %v2953 = vmul.f32 %v2729, %v2908
    %v2954 = vmul.f32 %v2730, %v2913
    %v2955 = vmul.f32 %v2731, %v2918
    %v2956 = vmul.f32 %v2732, %v2923
    %v2957 = vadd.f32 %v2925, %v2926
    %v2958 = vadd.f32 %v2957, %v2927
    %v2959 = vadd.f32 %v2958, %v2928
    %v2960 = vadd.f32 %v2959, %v2929
    %v2961 = vadd.f32 %v2960, %v2930
    %v2962 = vadd.f32 %v2961, %v2931
    %v2963 = vadd.f32 %v2962, %v2932
    %v2964 = vadd.f32 %v2963, %v2933
    %v2965 = vadd.f32 %v2964, %v2934
    %v2966 = vadd.f32 %v2965, %v2935
    %v2967 = vadd.f32 %v2966, %v2936
    %v2968 = vadd.f32 %v2967, %v2937
    %v2969 = vadd.f32 %v2968, %v2938
    %v2970 = vadd.f32 %v2969, %v2939
    %v2971 = vadd.f32 %v2970, %v2940
    %v2972 = vadd.f32 %v2971, %v2941
    %v2973 = vadd.f32 %v2972, %v2942
    %v2974 = vadd.f32 %v2973, %v2943
    %v2975 = vadd.f32 %v2974, %v2944
    %v2976 = vadd.f32 %v2975, %v2945
    %v2977 = vadd.f32 %v2976, %v2946
    %v2978 = vadd.f32 %v2977, %v2947
    %v2979 = vadd.f32 %v2978, %v2948
    %v2980 = vadd.f32 %v2979, %v2949
    %v2981 = vadd.f32 %v2980, %v2950
    %v2982 = vadd.f32 %v2981, %v2951
    %v2983 = vadd.f32 %v2982, %v2952
    %v2984 = vadd.f32 %v2983, %v2953
    %v2985 = vadd.f32 %v2984, %v2954
    %v2986 = vadd.f32 %v2985, %v2955
    %v2987 = vadd.f32 %v2986, %v2956
    %v2988 = vrot.slane %v2987, 4
    %v2989 = vadd.f32 %v2987, %v2988
    %v2990 = vrot.slane %v2989, 2
    %v2991 = vadd.f32 %v2989, %v2990
    %v2992 = vrot.slane %v2991, 1
    %v2993 = vadd.f32 %v2991, %v2992
    %v2994 = vld [vmem:[#allocation2] sm:$0x1]
    %2996 = vset.pattern.permute.xlu0 0
    %2997 = vperm.xlu0 %2996, %v2994
    %v2998 = vpop.permute.xlu0 %2997
    %v3000 = vlaneseq
    %v3001 = vshrl.u32 %v3000, 7
    %v3002 = vsub.s32 0, %v3001
    %v3003 = vrot.slane %v2998, %v3002
    %v3004 = vadd.f32 %v2993, %v3003
    %v3005 = vtanh.pop %v3004
    %v3006 = vmul.f32 %v3005, 2.0
    %3007 = vst [vmem:[#allocation3] sm:$0x1] %v3006
    // Predicated region
    $region30: #{actor_forward.1} parent=1 // pred_check
      _
    $region31: #{actor_forward.1} parent=1 // pred_check_branch
      %3009 = sbr.rel (0) target = $region33
    $region32: #{actor_forward.1} parent=1 // pred_region
      %s3011 = ssub.s32 16, 16
      %3012 = vsyncadd [#allocation4], %s3011
      %s3014 = sshll.u32 [#allocation3], 4
      %s3015 = int_to_ptr.vmem [resolvable:$true] %s3014
      %3017 = dma.vmem_to_hbm [thread:$0]  %s3015, 16, %s7, [#allocation4]
    $region33: #{actor_forward.1} parent=1 // pred_fallthru
      _
    // Predicated region
    $region34: #{actor_forward.1} parent=1 // pred_check
      _
    $region35: #{actor_forward.1} parent=1 // pred_check_branch
      %3019 = sbr.rel (0) target = $region37
    $region36: #{actor_forward.1} parent=1 // pred_region
      %3020 = dma.done [#allocation4], 16
    $region37: #{actor_forward.1} parent=1 // pred_fallthru
      _
    %3021 = vsyncpa [#allocation4], 1

</llo_original>
